<compile_context>
chip_gen: v5e
topology: v5e:2x2
jax: 0.10.0
libtpu: 0.0.40
codegen_flags: <defaults>
</compile_context>

<pallas_src>
import functools

import jax
import jax.numpy as jnp
from jax.experimental import pallas as pl
from jax.experimental.pallas import tpu as pltpu

EPS = 1e-5  # PyTorch nn.LayerNorm default

_ROW_TILES = (4096, 2048, 1024, 512, 256, 128, 64, 32, 16, 8)


# ---------------------------------------------------------------------------
# VMEM budgeting / tile selection
# ---------------------------------------------------------------------------
@functools.lru_cache(maxsize=None)
def _vmem_budget_bytes():
    cap = None
    try:
        cap = int(pltpu.get_tpu_info().vmem_capacity_bytes)
    except Exception:
        cap = None
    if not cap or cap <= 0:
        kind = ""
        try:
            kind = jax.devices()[0].device_kind.lower()
        except Exception:
            pass
        # v5e / v6e have 128 MiB of VMEM per TensorCore; v7x only 64 MiB.
        cap = 128 * 1024 * 1024 if ("v5" in kind or "v6" in kind) else 64 * 1024 * 1024
    return int(cap * 0.82)  # headroom for compiler-internal scratch / semaphores


def _pick_tile(total, candidates, fits, min_steps=1):
    """Largest candidate that divides `total` and fits the budget; prefer tiles that
    still give >= min_steps grid steps (pipelining / v7x megacore balance)."""
    best = None
    for t in candidates:
        if t > total or total % t != 0 or not fits(t):
            continue
        if best is None:
            best = t
        if total // t >= min_steps:
            return t
    return best if best is not None else total


def _ffn_tile_candidates(F):
    cands = [t for t in (4096, 2048, 1024, 512, 256, 128) if F % t == 0]
    return cands if cands else [F]


def _qkv_vmem_bytes(bm, D, act_b, out_b, w_b):
    return (2 * bm * D * act_b          # x row tile (double buffered)
            + 2 * D * D * w_b           # one (D, D) weight tile (double buffered)
            + 2 * bm * D * out_b        # stacked output tile (double buffered)
            + bm * D * 4                # live f32 matmul result
            + 4 * D * 4)                # bias


def _attn_vmem_bytes(tq, S, Dh, act_b, ctx_b, attn_b):
    return (2 * tq * Dh * act_b         # q tile
            + 4 * S * Dh * act_b        # k, v
            + 2 * tq * Dh * ctx_b       # ctx out
            + 2 * tq * S * attn_b       # attn out (0 if skipped)
            + 2 * tq * S * 4)           # live f32 scores/probs


def _ffn_vmem_bytes(bm, bf, D, act_b, out_b, w_b, scr_b):
    return (4 * bm * D * act_b          # ctx + residual row tiles
            + 2 * D * D * w_b           # wo
            + 4 * D * bf * w_b          # w1 + w2 tiles
            + 2 * bm * D * out_b        # output tile
            + bm * D * (scr_b + 4)      # y scratch + f32 accumulator
            + bm * bf * 4               # live f32 hidden tile
            + 16 * D * 4 + 2 * bf * 4)  # biases / LN params


# ---------------------------------------------------------------------------
# small math helpers (used inside kernels and in the pure-JAX reference)
# ---------------------------------------------------------------------------
def _layer_norm(y, gamma, beta):
    mu = jnp.mean(y, axis=-1, keepdims=True)
    var = jnp.mean((y - mu) ** 2, axis=-1, keepdims=True)
    return (y - mu) * jax.lax.rsqrt(var + EPS) * gamma + beta


# ---------------------------------------------------------------------------
# kernels
# ---------------------------------------------------------------------------
def qkv_kernel(x_ref, w_ref, b_ref, qkv_ref, *, compute_dtype):
    # grid = (row tile, which projection); one (bm, D) x (D, D) MXU matmul per step.
    y = jnp.dot(x_ref[...].astype(compute_dtype), w_ref[...].astype(compute_dtype),
                preferred_element_type=jnp.float32) + b_ref[...]
    qkv_ref[...] = y.astype(qkv_ref.dtype)


def attn_kernel(q_ref, k_ref, v_ref, ctx_ref, *attn_refs, compute_dtype, approx_recip):
    # q_ref: (tq, Dh), k_ref/v_ref: (S, Dh).  1/sqrt(Dh) already folded into W_q/b_q.
    q = q_ref[...].astype(compute_dtype)
    k = k_ref[...].astype(compute_dtype)
    s = jax.lax.dot_general(q, k, (((1,), (1,)), ((), ())),
                            preferred_element_type=jnp.float32)          # (tq, S)
    s = s - jnp.max(s, axis=-1, keepdims=True)
    p = jnp.exp(s)
    # approx_recip=True routes the softmax denominator to the EUP (prod knob);
    # default False for exact parity with torch.softmax.
    p = p * pl.reciprocal(jnp.sum(p, axis=-1, keepdims=True), approx=approx_recip)
    if attn_refs:                                   # skipped when return_attn=False
        attn_refs[0][...] = p.astype(attn_refs[0].dtype)
    ctx = jnp.dot(p.astype(compute_dtype), v_ref[...].astype(compute_dtype),
                  preferred_element_type=jnp.float32)
    ctx_ref[...] = ctx.astype(ctx_ref.dtype)


def proj_ffn_kernel(ctx_ref, res_ref, wo_ref, bo_ref, g1_ref, be1_ref,
                    w1_ref, b1_ref, w2_ref, b2_ref, g2_ref, be2_ref,
                    out_ref, y_scr, acc_scr, *, compute_dtype):
    # grid = (row tiles "parallel", FFN hidden tiles "arbitrary" reduction)
    f = pl.program_id(1)

    @pl.when(f == 0)
    def _init():
        # attention output projection + residual + LayerNorm, kept in VMEM
        o = jnp.dot(ctx_ref[...].astype(compute_dtype),
                    wo_ref[...].astype(compute_dtype),
                    preferred_element_type=jnp.float32) + bo_ref[...]
        y = _layer_norm(res_ref[...].astype(jnp.float32) + o, g1_ref[...], be1_ref[...])
        y_scr[...] = y.astype(y_scr.dtype)
        acc_scr[...] = jnp.zeros_like(acc_scr)

    # FFN with the hidden dim tiled as a reduction (ReLU is per hidden column, so each
    # partial tile can be reduced into the f32 accumulator immediately).
    h = jnp.dot(y_scr[...].astype(compute_dtype), w1_ref[...].astype(compute_dtype),
                preferred_element_type=jnp.float32) + b1_ref[...]
    h = jnp.maximum(h, 0.0)
    acc_scr[...] += jnp.dot(h.astype(compute_dtype), w2_ref[...].astype(compute_dtype),
                            preferred_element_type=jnp.float32)

    @pl.when(f == pl.num_programs(1) - 1)
    def _fin():
        o = acc_scr[...] + b2_ref[...]
        out_ref[...] = _layer_norm(y_scr[...].astype(jnp.float32) + o,
                                   g2_ref[...], be2_ref[...]).astype(out_ref.dtype)


# ---------------------------------------------------------------------------
# pallas_call wrappers
# ---------------------------------------------------------------------------
def qkv_proj(x2d, wqkv, bqkv, *, compute_dtype, out_dtype, budget):
    M, D = x2d.shape
    act_b = jnp.dtype(x2d.dtype).itemsize
    out_b = jnp.dtype(out_dtype).itemsize
    w_b = jnp.dtype(wqkv.dtype).itemsize
    limit = int(budget * 0.85)
    fits = lambda bm: _qkv_vmem_bytes(bm, D, act_b, out_b, w_b) <= limit
    bm = _pick_tile(M, _ROW_TILES, fits, min_steps=8)

    cost = pl.CostEstimate(
        flops=int(6 * M * D * D),
        transcendentals=0,
        bytes_accessed=int(M * D * act_b + (M // bm) * 3 * D * D * w_b
                           + 3 * M * D * out_b))

    return pl.pallas_call(
        functools.partial(qkv_kernel, compute_dtype=compute_dtype),
        grid=(M // bm, 3),
        in_specs=[pl.BlockSpec((bm, D), lambda i, j: (i, 0)),
                  pl.BlockSpec((None, D, D), lambda i, j: (j, 0, 0)),
                  pl.BlockSpec((None, 1, D), lambda i, j: (j, 0, 0))],
        out_specs=pl.BlockSpec((None, bm, D), lambda i, j: (j, i, 0)),
        out_shape=jax.ShapeDtypeStruct((3, M, D), out_dtype),
        compiler_params=pltpu.CompilerParams(
            dimension_semantics=("parallel", "parallel"),
            vmem_limit_bytes=int(budget)),
        cost_estimate=cost,
    )(x2d, wqkv, bqkv)


def mha_core(qkvh, *, compute_dtype, ctx_dtype, attn_dtype, write_attn, budget,
             approx_recip=False):
    _, BH, S, Dh = qkvh.shape
    act_b = jnp.dtype(qkvh.dtype).itemsize
    ctx_b = jnp.dtype(ctx_dtype).itemsize
    attn_b = jnp.dtype(attn_dtype).itemsize if write_attn else 0
    limit = int(budget * 0.85)
    fits = lambda tq: _attn_vmem_bytes(tq, S, Dh, act_b, ctx_b, attn_b) <= limit
    tq = _pick_tile(S, _ROW_TILES, fits, min_steps=1)

    q_spec = pl.BlockSpec((None, None, tq, Dh), lambda h, i: (0, h, i, 0))
    k_spec = pl.BlockSpec((None, None, S, Dh), lambda h, i: (1, h, 0, 0))
    v_spec = pl.BlockSpec((None, None, S, Dh), lambda h, i: (2, h, 0, 0))
    ctx_spec = pl.BlockSpec((None, tq, Dh), lambda h, i: (h, i, 0))

    if write_attn:
        out_specs = (ctx_spec, pl.BlockSpec((None, tq, S), lambda h, i: (h, i, 0)))
        out_shape = (jax.ShapeDtypeStruct((BH, S, Dh), ctx_dtype),
                     jax.ShapeDtypeStruct((BH, S, S), attn_dtype))
    else:
        out_specs = ctx_spec
        out_shape = jax.ShapeDtypeStruct((BH, S, Dh), ctx_dtype)

    cost = pl.CostEstimate(
        flops=int(4 * BH * S * S * Dh),
        transcendentals=int(BH * S * S),
        bytes_accessed=int(3 * BH * S * Dh * act_b + BH * S * Dh * ctx_b
                           + BH * S * S * attn_b))

    result = pl.pallas_call(
        functools.partial(attn_kernel, compute_dtype=compute_dtype,
                          approx_recip=approx_recip),
        grid=(BH, S // tq),
        in_specs=[q_spec, k_spec, v_spec],
        out_specs=out_specs,
        out_shape=out_shape,
        compiler_params=pltpu.CompilerParams(
            dimension_semantics=("parallel", "parallel"),
            vmem_limit_bytes=int(budget)),
        cost_estimate=cost,
    )(qkvh, qkvh, qkvh)

    if write_attn:
        ctx, attn = result
        return ctx, attn
    return result, None


def proj_ffn(ctx2d, res2d, p, *, compute_dtype, out_dtype, budget):
    M, D = ctx2d.shape
    F = p["w1"].shape[1]
    act_b = jnp.dtype(ctx2d.dtype).itemsize
    out_b = jnp.dtype(out_dtype).itemsize
    w_b = jnp.dtype(p["w1"].dtype).itemsize
    scr_b = jnp.dtype(compute_dtype).itemsize
    limit = int(budget * 0.85)

    f_cands = _ffn_tile_candidates(F)
    bf_min = f_cands[-1]
    fits_bm = lambda bm: _ffn_vmem_bytes(bm, bf_min, D, act_b, out_b, w_b, scr_b) <= limit
    bm = _pick_tile(M, _ROW_TILES, fits_bm, min_steps=8)
    fits_bf = lambda bf: _ffn_vmem_bytes(bm, bf, D, act_b, out_b, w_b, scr_b) <= limit
    bf = _pick_tile(F, tuple(f_cands), fits_bf, min_steps=1)

    row = pl.BlockSpec((bm, D), lambda i, f: (i, 0))
    pin = lambda shape: pl.BlockSpec(shape, lambda i, f: (0, 0))

    cost = pl.CostEstimate(
        flops=int(2 * M * D * D + 4 * M * D * F),
        transcendentals=int(2 * M),
        bytes_accessed=int(2 * M * D * act_b + M * D * out_b
                           + (M // bm) * (D * D + 2 * D * F) * w_b))

    return pl.pallas_call(
        functools.partial(proj_ffn_kernel, compute_dtype=compute_dtype),
        grid=(M // bm, F // bf),
        in_specs=[row, row,
                  pin(p["wo"].shape), pin(p["bo"].shape),
                  pin(p["g1"].shape), pin(p["beta1"].shape),
                  pl.BlockSpec((D, bf), lambda i, f: (0, f)),
                  pl.BlockSpec((1, bf), lambda i, f: (0, f)),
                  pl.BlockSpec((bf, D), lambda i, f: (f, 0)),
                  pin(p["b2"].shape), pin(p["g2"].shape), pin(p["beta2"].shape)],
        out_specs=pl.BlockSpec((bm, D), lambda i, f: (i, 0)),
        out_shape=jax.ShapeDtypeStruct((M, D), out_dtype),
        scratch_shapes=[pltpu.VMEM((bm, D), compute_dtype),   # post-attention LN acts
                        pltpu.VMEM((bm, D), jnp.float32)],    # FFN f32 accumulator
        compiler_params=pltpu.CompilerParams(
            dimension_semantics=("parallel", "arbitrary"),
            vmem_limit_bytes=int(budget)),
        cost_estimate=cost,
    )(ctx2d, res2d, p["wo"], p["bo"], p["g1"], p["beta1"],
      p["w1"], p["b1"], p["w2"], p["b2"], p["g2"], p["beta2"])


# ---------------------------------------------------------------------------
# parameter fusion (one-time, OUTSIDE the per-forward path)
# ---------------------------------------------------------------------------
def fuse_layer_params(p, num_heads, weight_dtype=jnp.bfloat16):
    """Stack W_q/W_k/W_v into (3, D, D) (1/sqrt(Dh) folded into W_q, b_q) and cast the
    large matmul weights to the streaming dtype.  Biases / LN params stay f32."""
    D = p["wq"].shape[0]
    scale = float(D // num_heads) ** -0.5
    wqkv = jnp.stack([p["wq"] * scale, p["wk"], p["wv"]], axis=0)   # (3, D, D)
    bqkv = jnp.stack([p["bq"] * scale, p["bk"], p["bv"]], axis=0)   # (3, 1, D)
    return dict(
        wqkv=wqkv.astype(weight_dtype),
        bqkv=bqkv.astype(jnp.float32),
        wo=p["wo"].astype(weight_dtype), bo=p["bo"].astype(jnp.float32),
        g1=p["g1"].astype(jnp.float32), beta1=p["beta1"].astype(jnp.float32),
        w1=p["w1"].astype(weight_dtype), b1=p["b1"].astype(jnp.float32),
        w2=p["w2"].astype(weight_dtype), b2=p["b2"].astype(jnp.float32),
        g2=p["g2"].astype(jnp.float32), beta2=p["beta2"].astype(jnp.float32),
    )


# ---------------------------------------------------------------------------
# encoder forward (XLA glue: free contiguous reshapes + layer loop)
# ---------------------------------------------------------------------------
def encoder_forward(x, fused_params, num_heads, *,
                    compute_dtype=jnp.bfloat16,
                    activation_dtype=jnp.bfloat16,
                    attn_dtype=jnp.bfloat16,
                    return_attn=True,
                    approx_softmax_recip=False):
    B, S, D = x.shape
    H = num_heads
    assert D % H == 0, "model_dim must be divisible by num_heads"
    Dh = D // H
    M = B * S
    budget = _vmem_budget_bytes()

    out2d = x.reshape(M, D).astype(activation_dtype)
    attentions = []
    n_layers = len(fused_params)
    for li, p in enumerate(fused_params):
        res2d = out2d                                           # attention residual
        qkv = qkv_proj(res2d, p["wqkv"], p["bqkv"],
                       compute_dtype=compute_dtype, out_dtype=activation_dtype,
                       budget=budget)                           # (3, M, D)
        # reproduce torch .view(B*num_heads, -1, dim_per_head) on contiguous data
        qkvh = qkv.reshape(3, B * H, S, Dh)
        ctx, attn = mha_core(qkvh, compute_dtype=compute_dtype,
                             ctx_dtype=activation_dtype, attn_dtype=attn_dtype,
                             write_attn=return_attn, budget=budget,
                             approx_recip=approx_softmax_recip)
        ctx2d = ctx.reshape(M, D)                               # torch .view(B, -1, D)
        layer_out_dtype = activation_dtype if li + 1 < n_layers else jnp.float32
        out2d = proj_ffn(ctx2d, res2d, p, compute_dtype=compute_dtype,
                         out_dtype=layer_out_dtype, budget=budget)
        attentions.append(attn)                                 # (B*H, S, S)
    return out2d.reshape(B, S, D), attentions


# ---------------------------------------------------------------------------
# pure-JAX f32 reference (matches the PyTorch module semantics)
# ---------------------------------------------------------------------------
def encoder_reference(x, params, num_heads):
    B, S, D = x.shape
    H = num_heads
    Dh = D // H
    scale = float(Dh) ** -0.5
    out = x
    attns = []
    for p in params:
        x2d = out.reshape(B * S, D)
        q = (x2d @ p["wq"] + p["bq"]).reshape(B * H, S, Dh)
        k = (x2d @ p["wk"] + p["bk"]).reshape(B * H, S, Dh)
        v = (x2d @ p["wv"] + p["bv"]).reshape(B * H, S, Dh)
        s = jnp.einsum("bqd,bkd->bqk", q, k) * scale
        a = jax.nn.softmax(s, axis=-1)
        ctx = jnp.einsum("bqk,bkd->bqd", a, v).reshape(B * S, D)
        y = _layer_norm(x2d + ctx @ p["wo"] + p["bo"], p["g1"], p["beta1"])
        ffn = jnp.maximum(y @ p["w1"] + p["b1"], 0.0) @ p["w2"] + p["b2"]
        out = _layer_norm(y + ffn, p["g2"], p["beta2"]).reshape(B, S, D)
        attns.append(a)
    return out, attns


# ---------------------------------------------------------------------------
# deterministic synthetic parameters
# ---------------------------------------------------------------------------
def init_layer_params(key, model_dim, ffn_dim):
    ks = jax.random.split(key, 10)
    n = lambda k, shape: 0.02 * jax.random.normal(k, shape, jnp.float32)
    ones = lambda d: jnp.ones((1, d), jnp.float32)
    zeros = lambda d: jnp.zeros((1, d), jnp.float32)
    return dict(
        wq=n(ks[0], (model_dim, model_dim)), bq=n(ks[1], (1, model_dim)),
        wk=n(ks[2], (model_dim, model_dim)), bk=n(ks[3], (1, model_dim)),
        wv=n(ks[4], (model_dim, model_dim)), bv=n(ks[5], (1, model_dim)),
        wo=n(ks[6], (model_dim, model_dim)), bo=n(ks[7], (1, model_dim)),
        g1=ones(model_dim), beta1=zeros(model_dim),
        w1=n(ks[8], (model_dim, ffn_dim)), b1=zeros(ffn_dim),
        w2=n(ks[9], (ffn_dim, model_dim)), b2=zeros(model_dim),
        g2=ones(model_dim), beta2=zeros(model_dim),
    )


if __name__ == "__main__":
    NUM_LAYERS, MODEL_DIM, NUM_HEADS, FFN_DIM = 2, 32, 4, 64
    B, S = 2, 8

    key = jax.random.PRNGKey(0)
    kx, kp = jax.random.split(key)
    x = jax.random.normal(kx, (B, S, MODEL_DIM), jnp.float32)

    layer_keys = jax.random.split(kp, NUM_LAYERS)
    raw_params = [init_layer_params(layer_keys[i], MODEL_DIM, FFN_DIM)
                  for i in range(NUM_LAYERS)]
    # One-time parameter fusion/cast, hoisted out of the per-forward path.
    fused_params = [fuse_layer_params(p, NUM_HEADS) for p in raw_params]

    fwd = jax.jit(functools.partial(encoder_forward, num_heads=NUM_HEADS))
    out, attns = fwd(x, fused_params)
    out = jax.block_until_ready(out)
    attns = [jax.block_until_ready(a) for a in attns]

    assert out.shape == (B, S, MODEL_DIM) and out.dtype == jnp.float32
    assert all(a.shape == (B * NUM_HEADS, S, S) for a in attns)

    # numerical sanity check vs. a pure-JAX f32 reference (generous bf16 tolerance)
    ref_out, ref_attns = encoder_reference(x, raw_params, NUM_HEADS)
    assert float(jnp.max(jnp.abs(out - ref_out))) < 1e-1
    assert float(jnp.max(jnp.abs(attns[0].astype(jnp.float32) - ref_attns[0]))) < 5e-2

    print("KERNEL_OK")
</pallas_src>

<mosaic_0001>
module attributes {stable_mosaic.version = 11 : i64} {
  func.func @attn_kernel(%arg0: i32, %arg1: i32, %arg2: memref<1x1x8x8xbf16, #tpu.memory_space<vmem>>, %arg3: memref<1x1x8x8xbf16, #tpu.memory_space<vmem>>, %arg4: memref<1x1x8x8xbf16, #tpu.memory_space<vmem>>, %arg5: memref<1x8x8xbf16, #tpu.memory_space<vmem>>, %arg6: memref<1x8x8xbf16, #tpu.memory_space<vmem>>) attributes {dimension_semantics = [#tpu.dimension_semantics<parallel>, #tpu.dimension_semantics<parallel>], iteration_bounds = array<i64: 8, 1>, scalar_prefetch = 0 : i64, scratch_operands = 0 : i64, tpu.core_type = #tpu.core_type<tc>, window_params = [{transform_indices = @transform_0, window_bounds = array<i64: 1, 1, 8, 8>}, {transform_indices = @transform_1, window_bounds = array<i64: 1, 1, 8, 8>}, {transform_indices = @transform_2, window_bounds = array<i64: 1, 1, 8, 8>}, {transform_indices = @transform_3, window_bounds = array<i64: 1, 8, 8>}, {transform_indices = @transform_4, window_bounds = array<i64: 1, 8, 8>}]} {
    %c0 = arith.constant 0 : index
    %c0_0 = arith.constant 0 : index
    %c0_1 = arith.constant 0 : index
    %c0_2 = arith.constant 0 : index
    %0 = vector.load %arg2[%c0, %c0_0, %c0_1, %c0_2] : memref<1x1x8x8xbf16, #tpu.memory_space<vmem>>, vector<1x1x8x8xbf16>
    %1 = vector.shape_cast %0 : vector<1x1x8x8xbf16> to vector<8x8xbf16>
    %c0_3 = arith.constant 0 : index
    %c0_4 = arith.constant 0 : index
    %c0_5 = arith.constant 0 : index
    %c0_6 = arith.constant 0 : index
    %2 = vector.load %arg3[%c0_3, %c0_4, %c0_5, %c0_6] : memref<1x1x8x8xbf16, #tpu.memory_space<vmem>>, vector<1x1x8x8xbf16>
    %3 = vector.shape_cast %2 : vector<1x1x8x8xbf16> to vector<8x8xbf16>
    %cst = arith.constant dense<0.000000e+00> : vector<8x8xf32>
    %4 = tpu.matmul %1, %3, %cst {dimension_numbers = #tpu.dot_dimension_numbers<[1], [1], [0], [0], [0, 0, 1, 0], [], []>} : vector<8x8xbf16>, vector<8x8xbf16>, vector<8x8xf32> -> vector<8x8xf32>
    %cst_7 = arith.constant dense<0xFF800000> : vector<8xf32>
    %5 = vector.multi_reduction <maximumf>, %4, %cst_7 [1] : vector<8x8xf32> to vector<8xf32>
    %6 = vector.shape_cast %5 : vector<8xf32> to vector<8x1xf32>
    %7 = vector.broadcast %6 : vector<8x1xf32> to vector<8x8xf32>
    %8 = arith.subf %4, %7 : vector<8x8xf32>
    %9 = math.exp %8 : vector<8x8xf32>
    %cst_8 = arith.constant dense<0.000000e+00> : vector<8xf32>
    %10 = vector.multi_reduction <add>, %9, %cst_8 [1] : vector<8x8xf32> to vector<8xf32>
    %11 = vector.shape_cast %10 : vector<8xf32> to vector<8x1xf32>
    %12 = tpu.reciprocal %11 : vector<8x1xf32> -> vector<8x1xf32>
    %13 = vector.broadcast %12 : vector<8x1xf32> to vector<8x8xf32>
    %14 = arith.mulf %9, %13 : vector<8x8xf32>
    %15 = arith.truncf %14 : vector<8x8xf32> to vector<8x8xbf16>
    %c0_9 = arith.constant 0 : index
    %c0_10 = arith.constant 0 : index
    %c0_11 = arith.constant 0 : index
    %16 = vector.load %arg6[%c0_9, %c0_10, %c0_11] : memref<1x8x8xbf16, #tpu.memory_space<vmem>>, vector<1x8x8xbf16>
    %17 = vector.shape_cast %16 : vector<1x8x8xbf16> to vector<8x8xbf16>
    %18 = vector.shape_cast %15 : vector<8x8xbf16> to vector<1x8x8xbf16>
    tpu.vector_store %arg6[%c0_9, %c0_10, %c0_11], %18 {strides = array<i32>} : memref<1x8x8xbf16, #tpu.memory_space<vmem>>, vector<1x8x8xbf16>,
    %19 = arith.truncf %14 : vector<8x8xf32> to vector<8x8xbf16>
    %c0_12 = arith.constant 0 : index
    %c0_13 = arith.constant 0 : index
    %c0_14 = arith.constant 0 : index
    %c0_15 = arith.constant 0 : index
    %20 = vector.load %arg4[%c0_12, %c0_13, %c0_14, %c0_15] : memref<1x1x8x8xbf16, #tpu.memory_space<vmem>>, vector<1x1x8x8xbf16>
    %21 = vector.shape_cast %20 : vector<1x1x8x8xbf16> to vector<8x8xbf16>
    %cst_16 = arith.constant dense<0.000000e+00> : vector<8x8xf32>
    %22 = tpu.matmul %19, %21, %cst_16 {dimension_numbers = #tpu.dot_dimension_numbers<[1], [0], [0], [1], [0, 0, 1, 1], [], []>} : vector<8x8xbf16>, vector<8x8xbf16>, vector<8x8xf32> -> vector<8x8xf32>
    %23 = arith.truncf %22 : vector<8x8xf32> to vector<8x8xbf16>
    %c0_17 = arith.constant 0 : index
    %c0_18 = arith.constant 0 : index
    %c0_19 = arith.constant 0 : index
    %24 = vector.load %arg5[%c0_17, %c0_18, %c0_19] : memref<1x8x8xbf16, #tpu.memory_space<vmem>>, vector<1x8x8xbf16>
    %25 = vector.shape_cast %24 : vector<1x8x8xbf16> to vector<8x8xbf16>
    %26 = vector.shape_cast %23 : vector<8x8xbf16> to vector<1x8x8xbf16>
    tpu.vector_store %arg5[%c0_17, %c0_18, %c0_19], %26 {strides = array<i32>} : memref<1x8x8xbf16, #tpu.memory_space<vmem>>, vector<1x8x8xbf16>,
    return
  }
  func.func @transform_0(%arg0: i32, %arg1: i32) -> (i32, i32, i32, i32) {
    %c0_i32 = arith.constant 0 : i32
    %c0_i32_0 = arith.constant 0 : i32
    %c0_i32_1 = arith.constant 0 : i32
    return %c0_i32, %arg0, %arg1, %c0_i32_0 : i32, i32, i32, i32
  }
  func.func @transform_1(%arg0: i32, %arg1: i32) -> (i32, i32, i32, i32) {
    %c1_i32 = arith.constant 1 : i32
    %c0_i32 = arith.constant 0 : i32
    %c0_i32_0 = arith.constant 0 : i32
    %c0_i32_1 = arith.constant 0 : i32
    return %c1_i32, %arg0, %c0_i32, %c0_i32_0 : i32, i32, i32, i32
  }
  func.func @transform_2(%arg0: i32, %arg1: i32) -> (i32, i32, i32, i32) {
    %c2_i32 = arith.constant 2 : i32
    %c0_i32 = arith.constant 0 : i32
    %c0_i32_0 = arith.constant 0 : i32
    %c0_i32_1 = arith.constant 0 : i32
    return %c2_i32, %arg0, %c0_i32, %c0_i32_0 : i32, i32, i32, i32
  }
  func.func @transform_3(%arg0: i32, %arg1: i32) -> (i32, i32, i32) {
    %c0_i32 = arith.constant 0 : i32
    %c0_i32_0 = arith.constant 0 : i32
    return %arg0, %arg1, %c0_i32 : i32, i32, i32
  }
  func.func @transform_4(%arg0: i32, %arg1: i32) -> (i32, i32, i32) {
    %c0_i32 = arith.constant 0 : i32
    %c0_i32_0 = arith.constant 0 : i32
    return %arg0, %arg1, %c0_i32 : i32, i32, i32
  }
}

module attributes {stable_mosaic.version = 11 : i64} {
  func.func @qkv_kernel(%arg0: i32, %arg1: i32, %arg2: memref<16x32xbf16, #tpu.memory_space<vmem>>, %arg3: memref<1x32x32xbf16, #tpu.memory_space<vmem>>, %arg4: memref<1x1x32xf32, #tpu.memory_space<vmem>>, %arg5: memref<1x16x32xbf16, #tpu.memory_space<vmem>>) attributes {dimension_semantics = [#tpu.dimension_semantics<parallel>, #tpu.dimension_semantics<parallel>], iteration_bounds = array<i64: 1, 3>, scalar_prefetch = 0 : i64, scratch_operands = 0 : i64, tpu.core_type = #tpu.core_type<tc>, window_params = [{transform_indices = @transform_0, window_bounds = array<i64: 16, 32>}, {transform_indices = @transform_1, window_bounds = array<i64: 1, 32, 32>}, {transform_indices = @transform_2, window_bounds = array<i64: 1, 1, 32>}, {transform_indices = @transform_3, window_bounds = array<i64: 1, 16, 32>}]} {
    %c0 = arith.constant 0 : index
    %c0_0 = arith.constant 0 : index
    %0 = vector.load %arg2[%c0, %c0_0] : memref<16x32xbf16, #tpu.memory_space<vmem>>, vector<16x32xbf16>
    %c0_1 = arith.constant 0 : index
    %c0_2 = arith.constant 0 : index
    %c0_3 = arith.constant 0 : index
    %1 = vector.load %arg3[%c0_1, %c0_2, %c0_3] : memref<1x32x32xbf16, #tpu.memory_space<vmem>>, vector<1x32x32xbf16>
    %2 = vector.shape_cast %1 : vector<1x32x32xbf16> to vector<32x32xbf16>
    %cst = arith.constant dense<0.000000e+00> : vector<16x32xf32>
    %3 = tpu.matmul %0, %2, %cst {dimension_numbers = #tpu.dot_dimension_numbers<[1], [0], [0], [1], [0, 0, 1, 1], [], []>} : vector<16x32xbf16>, vector<32x32xbf16>, vector<16x32xf32> -> vector<16x32xf32>
    %c0_4 = arith.constant 0 : index
    %c0_5 = arith.constant 0 : index
    %c0_6 = arith.constant 0 : index
    %4 = vector.load %arg4[%c0_4, %c0_5, %c0_6] : memref<1x1x32xf32, #tpu.memory_space<vmem>>, vector<1x1x32xf32>
    %5 = vector.shape_cast %4 : vector<1x1x32xf32> to vector<1x32xf32>
    %6 = vector.broadcast %5 : vector<1x32xf32> to vector<16x32xf32>
    %7 = arith.addf %3, %6 : vector<16x32xf32>
    %8 = arith.truncf %7 : vector<16x32xf32> to vector<16x32xbf16>
    %c0_7 = arith.constant 0 : index
    %c0_8 = arith.constant 0 : index
    %c0_9 = arith.constant 0 : index
    %9 = vector.load %arg5[%c0_7, %c0_8, %c0_9] : memref<1x16x32xbf16, #tpu.memory_space<vmem>>, vector<1x16x32xbf16>
    %10 = vector.shape_cast %9 : vector<1x16x32xbf16> to vector<16x32xbf16>
    %11 = vector.shape_cast %8 : vector<16x32xbf16> to vector<1x16x32xbf16>
    tpu.vector_store %arg5[%c0_7, %c0_8, %c0_9], %11 {strides = array<i32>} : memref<1x16x32xbf16, #tpu.memory_space<vmem>>, vector<1x16x32xbf16>,
    return
  }
  func.func @transform_0(%arg0: i32, %arg1: i32) -> (i32, i32) {
    %c0_i32 = arith.constant 0 : i32
    %c0_i32_0 = arith.constant 0 : i32
    return %arg0, %c0_i32 : i32, i32
  }
  func.func @transform_1(%arg0: i32, %arg1: i32) -> (i32, i32, i32) {
    %c0_i32 = arith.constant 0 : i32
    %c0_i32_0 = arith.constant 0 : i32
    %c0_i32_1 = arith.constant 0 : i32
    return %arg1, %c0_i32, %c0_i32_0 : i32, i32, i32
  }
  func.func @transform_2(%arg0: i32, %arg1: i32) -> (i32, i32, i32) {
    %c0_i32 = arith.constant 0 : i32
    %c0_i32_0 = arith.constant 0 : i32
    %c0_i32_1 = arith.constant 0 : i32
    return %arg1, %c0_i32, %c0_i32_0 : i32, i32, i32
  }
  func.func @transform_3(%arg0: i32, %arg1: i32) -> (i32, i32, i32) {
    %c0_i32 = arith.constant 0 : i32
    %c0_i32_0 = arith.constant 0 : i32
    return %arg1, %arg0, %c0_i32 : i32, i32, i32
  }
}

module attributes {stable_mosaic.version = 11 : i64} {
  func.func @proj_ffn_kernel(%arg0: i32, %arg1: i32, %arg2: memref<16x32xbf16, #tpu.memory_space<vmem>>, %arg3: memref<16x32xbf16, #tpu.memory_space<vmem>>, %arg4: memref<32x32xbf16, #tpu.memory_space<vmem>>, %arg5: memref<1x32xf32, #tpu.memory_space<vmem>>, %arg6: memref<1x32xf32, #tpu.memory_space<vmem>>, %arg7: memref<1x32xf32, #tpu.memory_space<vmem>>, %arg8: memref<32x64xbf16, #tpu.memory_space<vmem>>, %arg9: memref<1x64xf32, #tpu.memory_space<vmem>>, %arg10: memref<64x32xbf16, #tpu.memory_space<vmem>>, %arg11: memref<1x32xf32, #tpu.memory_space<vmem>>, %arg12: memref<1x32xf32, #tpu.memory_space<vmem>>, %arg13: memref<1x32xf32, #tpu.memory_space<vmem>>, %arg14: memref<16x32xbf16, #tpu.memory_space<vmem>>, %arg15: memref<16x32xbf16, #tpu.memory_space<vmem>>, %arg16: memref<16x32xf32, #tpu.memory_space<vmem>>) attributes {dimension_semantics = [#tpu.dimension_semantics<parallel>, #tpu.dimension_semantics<arbitrary>], iteration_bounds = array<i64: 1, 1>, scalar_prefetch = 0 : i64, scratch_operands = 2 : i64, tpu.core_type = #tpu.core_type<tc>, window_params = [{transform_indices = @transform_0, window_bounds = array<i64: 16, 32>}, {transform_indices = @transform_1, window_bounds = array<i64: 16, 32>}, {pipeline_mode = #tpu.pipeline_mode<synchronous>, transform_indices = @transform_2, window_bounds = array<i64: 32, 32>}, {pipeline_mode = #tpu.pipeline_mode<synchronous>, transform_indices = @transform_3, window_bounds = array<i64: 1, 32>}, {pipeline_mode = #tpu.pipeline_mode<synchronous>, transform_indices = @transform_4, window_bounds = array<i64: 1, 32>}, {pipeline_mode = #tpu.pipeline_mode<synchronous>, transform_indices = @transform_5, window_bounds = array<i64: 1, 32>}, {transform_indices = @transform_6, window_bounds = array<i64: 32, 64>}, {transform_indices = @transform_7, window_bounds = array<i64: 1, 64>}, {transform_indices = @transform_8, window_bounds = array<i64: 64, 32>}, {pipeline_mode = #tpu.pipeline_mode<synchronous>, transform_indices = @transform_9, window_bounds = array<i64: 1, 32>}, {pipeline_mode = #tpu.pipeline_mode<synchronous>, transform_indices = @transform_10, window_bounds = array<i64: 1, 32>}, {pipeline_mode = #tpu.pipeline_mode<synchronous>, transform_indices = @transform_11, window_bounds = array<i64: 1, 32>}, {transform_indices = @transform_12, window_bounds = array<i64: 16, 32>}]} {
    %c0_i32 = arith.constant 0 : i32
    %0 = arith.cmpi eq, %arg1, %c0_i32 : i32
    %1 = arith.extui %0 : i1 to i32
    %c0_i32_0 = arith.constant 0 : i32
    %2 = arith.cmpi ne, %1, %c0_i32_0 : i32
    scf.if %2 {
      %c0_16 = arith.constant 0 : index
      %c0_17 = arith.constant 0 : index
      %20 = vector.load %arg2[%c0_16, %c0_17] : memref<16x32xbf16, #tpu.memory_space<vmem>>, vector<16x32xbf16>
      %c0_18 = arith.constant 0 : index
      %c0_19 = arith.constant 0 : index
      %21 = vector.load %arg4[%c0_18, %c0_19] : memref<32x32xbf16, #tpu.memory_space<vmem>>, vector<32x32xbf16>
      %cst_20 = arith.constant dense<0.000000e+00> : vector<16x32xf32>
      %22 = tpu.matmul %20, %21, %cst_20 {dimension_numbers = #tpu.dot_dimension_numbers<[1], [0], [0], [1], [0, 0, 1, 1], [], []>} : vector<16x32xbf16>, vector<32x32xbf16>, vector<16x32xf32> -> vector<16x32xf32>
      %c0_21 = arith.constant 0 : index
      %c0_22 = arith.constant 0 : index
      %23 = vector.load %arg5[%c0_21, %c0_22] : memref<1x32xf32, #tpu.memory_space<vmem>>, vector<1x32xf32>
      %24 = vector.broadcast %23 : vector<1x32xf32> to vector<16x32xf32>
      %25 = arith.addf %22, %24 : vector<16x32xf32>
      %c0_23 = arith.constant 0 : index
      %c0_24 = arith.constant 0 : index
      %26 = vector.load %arg3[%c0_23, %c0_24] : memref<16x32xbf16, #tpu.memory_space<vmem>>, vector<16x32xbf16>
      %27 = arith.extf %26 : vector<16x32xbf16> to vector<16x32xf32>
      %28 = arith.addf %27, %25 : vector<16x32xf32>
      %c0_25 = arith.constant 0 : index
      %c0_26 = arith.constant 0 : index
      %29 = vector.load %arg6[%c0_25, %c0_26] : memref<1x32xf32, #tpu.memory_space<vmem>>, vector<1x32xf32>
      %c0_27 = arith.constant 0 : index
      %c0_28 = arith.constant 0 : index
      %30 = vector.load %arg7[%c0_27, %c0_28] : memref<1x32xf32, #tpu.memory_space<vmem>>, vector<1x32xf32>
      %cst_29 = arith.constant dense<0.000000e+00> : vector<16xf32>
      %31 = vector.multi_reduction <add>, %28, %cst_29 [1] : vector<16x32xf32> to vector<16xf32>
      %32 = vector.shape_cast %31 : vector<16xf32> to vector<16x1xf32>
      %cst_30 = arith.constant 3.200000e+01 : f32
      %33 = vector.broadcast %cst_30 : f32 to vector<16x1xf32>
      %34 = arith.divf %32, %33 : vector<16x1xf32>
      %35 = vector.broadcast %34 : vector<16x1xf32> to vector<16x32xf32>
      %36 = arith.subf %28, %35 : vector<16x32xf32>
      %37 = arith.mulf %36, %36 : vector<16x32xf32>
      %cst_31 = arith.constant dense<0.000000e+00> : vector<16xf32>
      %38 = vector.multi_reduction <add>, %37, %cst_31 [1] : vector<16x32xf32> to vector<16xf32>
      %39 = vector.shape_cast %38 : vector<16xf32> to vector<16x1xf32>
      %cst_32 = arith.constant 3.200000e+01 : f32
      %40 = vector.broadcast %cst_32 : f32 to vector<16x1xf32>
      %41 = arith.divf %39, %40 : vector<16x1xf32>
      %42 = vector.broadcast %34 : vector<16x1xf32> to vector<16x32xf32>
      %43 = arith.subf %28, %42 : vector<16x32xf32>
      %cst_33 = arith.constant 9.99999974E-6 : f32
      %44 = vector.broadcast %cst_33 : f32 to vector<16x1xf32>
      %45 = arith.addf %41, %44 : vector<16x1xf32>
      %46 = math.rsqrt %45 : vector<16x1xf32>
      %47 = vector.broadcast %46 : vector<16x1xf32> to vector<16x32xf32>
      %48 = arith.mulf %43, %47 : vector<16x32xf32>
      %49 = vector.broadcast %29 : vector<1x32xf32> to vector<16x32xf32>
      %50 = arith.mulf %48, %49 : vector<16x32xf32>
      %51 = vector.broadcast %30 : vector<1x32xf32> to vector<16x32xf32>
      %52 = arith.addf %50, %51 : vector<16x32xf32>
      %53 = arith.truncf %52 : vector<16x32xf32> to vector<16x32xbf16>
      %c0_34 = arith.constant 0 : index
      %c0_35 = arith.constant 0 : index
      %54 = vector.load %arg15[%c0_34, %c0_35] : memref<16x32xbf16, #tpu.memory_space<vmem>>, vector<16x32xbf16>
      tpu.vector_store %arg15[%c0_34, %c0_35], %53 {strides = array<i32>} : memref<16x32xbf16, #tpu.memory_space<vmem>>, vector<16x32xbf16>,
      %cst_36 = arith.constant 0.000000e+00 : f32
      %55 = vector.broadcast %cst_36 : f32 to vector<16x32xf32>
      %c0_37 = arith.constant 0 : index
      %c0_38 = arith.constant 0 : index
      %56 = vector.load %arg16[%c0_37, %c0_38] : memref<16x32xf32, #tpu.memory_space<vmem>>, vector<16x32xf32>
      tpu.vector_store %arg16[%c0_37, %c0_38], %55 {strides = array<i32>} : memref<16x32xf32, #tpu.memory_space<vmem>>, vector<16x32xf32>,
    } else {
    }
    %c0 = arith.constant 0 : index
    %c0_1 = arith.constant 0 : index
    %3 = vector.load %arg15[%c0, %c0_1] : memref<16x32xbf16, #tpu.memory_space<vmem>>, vector<16x32xbf16>
    %c0_2 = arith.constant 0 : index
    %c0_3 = arith.constant 0 : index
    %4 = vector.load %arg8[%c0_2, %c0_3] : memref<32x64xbf16, #tpu.memory_space<vmem>>, vector<32x64xbf16>
    %cst = arith.constant dense<0.000000e+00> : vector<16x64xf32>
    %5 = tpu.matmul %3, %4, %cst {dimension_numbers = #tpu.dot_dimension_numbers<[1], [0], [0], [1], [0, 0, 1, 1], [], []>} : vector<16x32xbf16>, vector<32x64xbf16>, vector<16x64xf32> -> vector<16x64xf32>
    %c0_4 = arith.constant 0 : index
    %c0_5 = arith.constant 0 : index
    %6 = vector.load %arg9[%c0_4, %c0_5] : memref<1x64xf32, #tpu.memory_space<vmem>>, vector<1x64xf32>
    %7 = vector.broadcast %6 : vector<1x64xf32> to vector<16x64xf32>
    %8 = arith.addf %5, %7 : vector<16x64xf32>
    %cst_6 = arith.constant 0.000000e+00 : f32
    %9 = vector.broadcast %cst_6 : f32 to vector<16x64xf32>
    %10 = arith.maximumf %8, %9 : vector<16x64xf32>
    %c0_7 = arith.constant 0 : index
    %c0_8 = arith.constant 0 : index
    %11 = vector.load %arg16[%c0_7, %c0_8] : memref<16x32xf32, #tpu.memory_space<vmem>>, vector<16x32xf32>
    %12 = arith.truncf %10 : vector<16x64xf32> to vector<16x64xbf16>
    %c0_9 = arith.constant 0 : index
    %c0_10 = arith.constant 0 : index
    %13 = vector.load %arg10[%c0_9, %c0_10] : memref<64x32xbf16, #tpu.memory_space<vmem>>, vector<64x32xbf16>
    %cst_11 = arith.constant dense<0.000000e+00> : vector<16x32xf32>
    %14 = tpu.matmul %12, %13, %cst_11 {dimension_numbers = #tpu.dot_dimension_numbers<[1], [0], [0], [1], [0, 0, 1, 1], [], []>} : vector<16x64xbf16>, vector<64x32xbf16>, vector<16x32xf32> -> vector<16x32xf32>
    %15 = arith.addf %11, %14 : vector<16x32xf32>
    %c0_12 = arith.constant 0 : index
    %c0_13 = arith.constant 0 : index
    %16 = vector.load %arg16[%c0_12, %c0_13] : memref<16x32xf32, #tpu.memory_space<vmem>>, vector<16x32xf32>
    tpu.vector_store %arg16[%c0_12, %c0_13], %15 {strides = array<i32>} : memref<16x32xf32, #tpu.memory_space<vmem>>, vector<16x32xf32>,
    %c0_i32_14 = arith.constant 0 : i32
    %17 = arith.cmpi eq, %arg1, %c0_i32_14 : i32
    %18 = arith.extui %17 : i1 to i32
    %c0_i32_15 = arith.constant 0 : i32
    %19 = arith.cmpi ne, %18, %c0_i32_15 : i32
    scf.if %19 {
      %c0_16 = arith.constant 0 : index
      %c0_17 = arith.constant 0 : index
      %20 = vector.load %arg16[%c0_16, %c0_17] : memref<16x32xf32, #tpu.memory_space<vmem>>, vector<16x32xf32>
      %c0_18 = arith.constant 0 : index
      %c0_19 = arith.constant 0 : index
      %21 = vector.load %arg11[%c0_18, %c0_19] : memref<1x32xf32, #tpu.memory_space<vmem>>, vector<1x32xf32>
      %22 = vector.broadcast %21 : vector<1x32xf32> to vector<16x32xf32>
      %23 = arith.addf %20, %22 : vector<16x32xf32>
      %c0_20 = arith.constant 0 : index
      %c0_21 = arith.constant 0 : index
      %24 = vector.load %arg15[%c0_20, %c0_21] : memref<16x32xbf16, #tpu.memory_space<vmem>>, vector<16x32xbf16>
      %25 = arith.extf %24 : vector<16x32xbf16> to vector<16x32xf32>
      %26 = arith.addf %25, %23 : vector<16x32xf32>
      %c0_22 = arith.constant 0 : index
      %c0_23 = arith.constant 0 : index
      %27 = vector.load %arg12[%c0_22, %c0_23] : memref<1x32xf32, #tpu.memory_space<vmem>>, vector<1x32xf32>
      %c0_24 = arith.constant 0 : index
      %c0_25 = arith.constant 0 : index
      %28 = vector.load %arg13[%c0_24, %c0_25] : memref<1x32xf32, #tpu.memory_space<vmem>>, vector<1x32xf32>
      %cst_26 = arith.constant dense<0.000000e+00> : vector<16xf32>
      %29 = vector.multi_reduction <add>, %26, %cst_26 [1] : vector<16x32xf32> to vector<16xf32>
      %30 = vector.shape_cast %29 : vector<16xf32> to vector<16x1xf32>
      %cst_27 = arith.constant 3.200000e+01 : f32
      %31 = vector.broadcast %cst_27 : f32 to vector<16x1xf32>
      %32 = arith.divf %30, %31 : vector<16x1xf32>
      %33 = vector.broadcast %32 : vector<16x1xf32> to vector<16x32xf32>
      %34 = arith.subf %26, %33 : vector<16x32xf32>
      %35 = arith.mulf %34, %34 : vector<16x32xf32>
      %cst_28 = arith.constant dense<0.000000e+00> : vector<16xf32>
      %36 = vector.multi_reduction <add>, %35, %cst_28 [1] : vector<16x32xf32> to vector<16xf32>
      %37 = vector.shape_cast %36 : vector<16xf32> to vector<16x1xf32>
      %cst_29 = arith.constant 3.200000e+01 : f32
      %38 = vector.broadcast %cst_29 : f32 to vector<16x1xf32>
      %39 = arith.divf %37, %38 : vector<16x1xf32>
      %40 = vector.broadcast %32 : vector<16x1xf32> to vector<16x32xf32>
      %41 = arith.subf %26, %40 : vector<16x32xf32>
      %cst_30 = arith.constant 9.99999974E-6 : f32
      %42 = vector.broadcast %cst_30 : f32 to vector<16x1xf32>
      %43 = arith.addf %39, %42 : vector<16x1xf32>
      %44 = math.rsqrt %43 : vector<16x1xf32>
      %45 = vector.broadcast %44 : vector<16x1xf32> to vector<16x32xf32>
      %46 = arith.mulf %41, %45 : vector<16x32xf32>
      %47 = vector.broadcast %27 : vector<1x32xf32> to vector<16x32xf32>
      %48 = arith.mulf %46, %47 : vector<16x32xf32>
      %49 = vector.broadcast %28 : vector<1x32xf32> to vector<16x32xf32>
      %50 = arith.addf %48, %49 : vector<16x32xf32>
      %51 = arith.truncf %50 : vector<16x32xf32> to vector<16x32xbf16>
      %c0_31 = arith.constant 0 : index
      %c0_32 = arith.constant 0 : index
      %52 = vector.load %arg14[%c0_31, %c0_32] : memref<16x32xbf16, #tpu.memory_space<vmem>>, vector<16x32xbf16>
      tpu.vector_store %arg14[%c0_31, %c0_32], %51 {strides = array<i32>} : memref<16x32xbf16, #tpu.memory_space<vmem>>, vector<16x32xbf16>,
    } else {
    }
    return
  }
  func.func @transform_0(%arg0: i32, %arg1: i32) -> (i32, i32) {
    %c0_i32 = arith.constant 0 : i32
    %c0_i32_0 = arith.constant 0 : i32
    return %arg0, %c0_i32 : i32, i32
  }
  func.func @transform_1(%arg0: i32, %arg1: i32) -> (i32, i32) {
    %c0_i32 = arith.constant 0 : i32
    %c0_i32_0 = arith.constant 0 : i32
    return %arg0, %c0_i32 : i32, i32
  }
  func.func @transform_2(%arg0: i32, %arg1: i32) -> (i32, i32) {
    %c0_i32 = arith.constant 0 : i32
    %c0_i32_0 = arith.constant 0 : i32
    %c0_i32_1 = arith.constant 0 : i32
    return %c0_i32, %c0_i32_0 : i32, i32
  }
  func.func @transform_3(%arg0: i32, %arg1: i32) -> (i32, i32) {
    %c0_i32 = arith.constant 0 : i32
    %c0_i32_0 = arith.constant 0 : i32
    %c0_i32_1 = arith.constant 0 : i32
    return %c0_i32, %c0_i32_0 : i32, i32
  }
  func.func @transform_4(%arg0: i32, %arg1: i32) -> (i32, i32) {
    %c0_i32 = arith.constant 0 : i32
    %c0_i32_0 = arith.constant 0 : i32
    %c0_i32_1 = arith.constant 0 : i32
    return %c0_i32, %c0_i32_0 : i32, i32
  }
  func.func @transform_5(%arg0: i32, %arg1: i32) -> (i32, i32) {
    %c0_i32 = arith.constant 0 : i32
    %c0_i32_0 = arith.constant 0 : i32
    %c0_i32_1 = arith.constant 0 : i32
    return %c0_i32, %c0_i32_0 : i32, i32
  }
  func.func @transform_6(%arg0: i32, %arg1: i32) -> (i32, i32) {
    %c0_i32 = arith.constant 0 : i32
    %c0_i32_0 = arith.constant 0 : i32
    return %c0_i32, %arg1 : i32, i32
  }
  func.func @transform_7(%arg0: i32, %arg1: i32) -> (i32, i32) {
    %c0_i32 = arith.constant 0 : i32
    %c0_i32_0 = arith.constant 0 : i32
    return %c0_i32, %arg1 : i32, i32
  }
  func.func @transform_8(%arg0: i32, %arg1: i32) -> (i32, i32) {
    %c0_i32 = arith.constant 0 : i32
    %c0_i32_0 = arith.constant 0 : i32
    return %arg1, %c0_i32 : i32, i32
  }
  func.func @transform_9(%arg0: i32, %arg1: i32) -> (i32, i32) {
    %c0_i32 = arith.constant 0 : i32
    %c0_i32_0 = arith.constant 0 : i32
    %c0_i32_1 = arith.constant 0 : i32
    return %c0_i32, %c0_i32_0 : i32, i32
  }
  func.func @transform_10(%arg0: i32, %arg1: i32) -> (i32, i32) {
    %c0_i32 = arith.constant 0 : i32
    %c0_i32_0 = arith.constant 0 : i32
    %c0_i32_1 = arith.constant 0 : i32
    return %c0_i32, %c0_i32_0 : i32, i32
  }
  func.func @transform_11(%arg0: i32, %arg1: i32) -> (i32, i32) {
    %c0_i32 = arith.constant 0 : i32
    %c0_i32_0 = arith.constant 0 : i32
    %c0_i32_1 = arith.constant 0 : i32
    return %c0_i32, %c0_i32_0 : i32, i32
  }
  func.func @transform_12(%arg0: i32, %arg1: i32) -> (i32, i32) {
    %c0_i32 = arith.constant 0 : i32
    %c0_i32_0 = arith.constant 0 : i32
    return %arg0, %c0_i32 : i32, i32
  }
}

module attributes {stable_mosaic.version = 11 : i64} {
  func.func @qkv_kernel(%arg0: i32, %arg1: i32, %arg2: memref<16x32xbf16, #tpu.memory_space<vmem>>, %arg3: memref<1x32x32xbf16, #tpu.memory_space<vmem>>, %arg4: memref<1x1x32xf32, #tpu.memory_space<vmem>>, %arg5: memref<1x16x32xbf16, #tpu.memory_space<vmem>>) attributes {dimension_semantics = [#tpu.dimension_semantics<parallel>, #tpu.dimension_semantics<parallel>], iteration_bounds = array<i64: 1, 3>, scalar_prefetch = 0 : i64, scratch_operands = 0 : i64, tpu.core_type = #tpu.core_type<tc>, window_params = [{transform_indices = @transform_0, window_bounds = array<i64: 16, 32>}, {transform_indices = @transform_1, window_bounds = array<i64: 1, 32, 32>}, {transform_indices = @transform_2, window_bounds = array<i64: 1, 1, 32>}, {transform_indices = @transform_3, window_bounds = array<i64: 1, 16, 32>}]} {
    %c0 = arith.constant 0 : index
    %c0_0 = arith.constant 0 : index
    %0 = vector.load %arg2[%c0, %c0_0] : memref<16x32xbf16, #tpu.memory_space<vmem>>, vector<16x32xbf16>
    %c0_1 = arith.constant 0 : index
    %c0_2 = arith.constant 0 : index
    %c0_3 = arith.constant 0 : index
    %1 = vector.load %arg3[%c0_1, %c0_2, %c0_3] : memref<1x32x32xbf16, #tpu.memory_space<vmem>>, vector<1x32x32xbf16>
    %2 = vector.shape_cast %1 : vector<1x32x32xbf16> to vector<32x32xbf16>
    %cst = arith.constant dense<0.000000e+00> : vector<16x32xf32>
    %3 = tpu.matmul %0, %2, %cst {dimension_numbers = #tpu.dot_dimension_numbers<[1], [0], [0], [1], [0, 0, 1, 1], [], []>} : vector<16x32xbf16>, vector<32x32xbf16>, vector<16x32xf32> -> vector<16x32xf32>
    %c0_4 = arith.constant 0 : index
    %c0_5 = arith.constant 0 : index
    %c0_6 = arith.constant 0 : index
    %4 = vector.load %arg4[%c0_4, %c0_5, %c0_6] : memref<1x1x32xf32, #tpu.memory_space<vmem>>, vector<1x1x32xf32>
    %5 = vector.shape_cast %4 : vector<1x1x32xf32> to vector<1x32xf32>
    %6 = vector.broadcast %5 : vector<1x32xf32> to vector<16x32xf32>
    %7 = arith.addf %3, %6 : vector<16x32xf32>
    %8 = arith.truncf %7 : vector<16x32xf32> to vector<16x32xbf16>
    %c0_7 = arith.constant 0 : index
    %c0_8 = arith.constant 0 : index
    %c0_9 = arith.constant 0 : index
    %9 = vector.load %arg5[%c0_7, %c0_8, %c0_9] : memref<1x16x32xbf16, #tpu.memory_space<vmem>>, vector<1x16x32xbf16>
    %10 = vector.shape_cast %9 : vector<1x16x32xbf16> to vector<16x32xbf16>
    %11 = vector.shape_cast %8 : vector<16x32xbf16> to vector<1x16x32xbf16>
    tpu.vector_store %arg5[%c0_7, %c0_8, %c0_9], %11 {strides = array<i32>} : memref<1x16x32xbf16, #tpu.memory_space<vmem>>, vector<1x16x32xbf16>,
    return
  }
  func.func @transform_0(%arg0: i32, %arg1: i32) -> (i32, i32) {
    %c0_i32 = arith.constant 0 : i32
    %c0_i32_0 = arith.constant 0 : i32
    return %arg0, %c0_i32 : i32, i32
  }
  func.func @transform_1(%arg0: i32, %arg1: i32) -> (i32, i32, i32) {
    %c0_i32 = arith.constant 0 : i32
    %c0_i32_0 = arith.constant 0 : i32
    %c0_i32_1 = arith.constant 0 : i32
    return %arg1, %c0_i32, %c0_i32_0 : i32, i32, i32
  }
  func.func @transform_2(%arg0: i32, %arg1: i32) -> (i32, i32, i32) {
    %c0_i32 = arith.constant 0 : i32
    %c0_i32_0 = arith.constant 0 : i32
    %c0_i32_1 = arith.constant 0 : i32
    return %arg1, %c0_i32, %c0_i32_0 : i32, i32, i32
  }
  func.func @transform_3(%arg0: i32, %arg1: i32) -> (i32, i32, i32) {
    %c0_i32 = arith.constant 0 : i32
    %c0_i32_0 = arith.constant 0 : i32
    return %arg1, %arg0, %c0_i32 : i32, i32, i32
  }
}

module attributes {stable_mosaic.version = 11 : i64} {
  func.func @proj_ffn_kernel(%arg0: i32, %arg1: i32, %arg2: memref<16x32xbf16, #tpu.memory_space<vmem>>, %arg3: memref<16x32xbf16, #tpu.memory_space<vmem>>, %arg4: memref<32x32xbf16, #tpu.memory_space<vmem>>, %arg5: memref<1x32xf32, #tpu.memory_space<vmem>>, %arg6: memref<1x32xf32, #tpu.memory_space<vmem>>, %arg7: memref<1x32xf32, #tpu.memory_space<vmem>>, %arg8: memref<32x64xbf16, #tpu.memory_space<vmem>>, %arg9: memref<1x64xf32, #tpu.memory_space<vmem>>, %arg10: memref<64x32xbf16, #tpu.memory_space<vmem>>, %arg11: memref<1x32xf32, #tpu.memory_space<vmem>>, %arg12: memref<1x32xf32, #tpu.memory_space<vmem>>, %arg13: memref<1x32xf32, #tpu.memory_space<vmem>>, %arg14: memref<16x32xf32, #tpu.memory_space<vmem>>, %arg15: memref<16x32xbf16, #tpu.memory_space<vmem>>, %arg16: memref<16x32xf32, #tpu.memory_space<vmem>>) attributes {dimension_semantics = [#tpu.dimension_semantics<parallel>, #tpu.dimension_semantics<arbitrary>], iteration_bounds = array<i64: 1, 1>, scalar_prefetch = 0 : i64, scratch_operands = 2 : i64, tpu.core_type = #tpu.core_type<tc>, window_params = [{transform_indices = @transform_0, window_bounds = array<i64: 16, 32>}, {transform_indices = @transform_1, window_bounds = array<i64: 16, 32>}, {pipeline_mode = #tpu.pipeline_mode<synchronous>, transform_indices = @transform_2, window_bounds = array<i64: 32, 32>}, {pipeline_mode = #tpu.pipeline_mode<synchronous>, transform_indices = @transform_3, window_bounds = array<i64: 1, 32>}, {pipeline_mode = #tpu.pipeline_mode<synchronous>, transform_indices = @transform_4, window_bounds = array<i64: 1, 32>}, {pipeline_mode = #tpu.pipeline_mode<synchronous>, transform_indices = @transform_5, window_bounds = array<i64: 1, 32>}, {transform_indices = @transform_6, window_bounds = array<i64: 32, 64>}, {transform_indices = @transform_7, window_bounds = array<i64: 1, 64>}, {transform_indices = @transform_8, window_bounds = array<i64: 64, 32>}, {pipeline_mode = #tpu.pipeline_mode<synchronous>, transform_indices = @transform_9, window_bounds = array<i64: 1, 32>}, {pipeline_mode = #tpu.pipeline_mode<synchronous>, transform_indices = @transform_10, window_bounds = array<i64: 1, 32>}, {pipeline_mode = #tpu.pipeline_mode<synchronous>, transform_indices = @transform_11, window_bounds = array<i64: 1, 32>}, {transform_indices = @transform_12, window_bounds = array<i64: 16, 32>}]} {
    %c0_i32 = arith.constant 0 : i32
    %0 = arith.cmpi eq, %arg1, %c0_i32 : i32
    %1 = arith.extui %0 : i1 to i32
    %c0_i32_0 = arith.constant 0 : i32
    %2 = arith.cmpi ne, %1, %c0_i32_0 : i32
    scf.if %2 {
      %c0_16 = arith.constant 0 : index
      %c0_17 = arith.constant 0 : index
      %20 = vector.load %arg2[%c0_16, %c0_17] : memref<16x32xbf16, #tpu.memory_space<vmem>>, vector<16x32xbf16>
      %c0_18 = arith.constant 0 : index
      %c0_19 = arith.constant 0 : index
      %21 = vector.load %arg4[%c0_18, %c0_19] : memref<32x32xbf16, #tpu.memory_space<vmem>>, vector<32x32xbf16>
      %cst_20 = arith.constant dense<0.000000e+00> : vector<16x32xf32>
      %22 = tpu.matmul %20, %21, %cst_20 {dimension_numbers = #tpu.dot_dimension_numbers<[1], [0], [0], [1], [0, 0, 1, 1], [], []>} : vector<16x32xbf16>, vector<32x32xbf16>, vector<16x32xf32> -> vector<16x32xf32>
      %c0_21 = arith.constant 0 : index
      %c0_22 = arith.constant 0 : index
      %23 = vector.load %arg5[%c0_21, %c0_22] : memref<1x32xf32, #tpu.memory_space<vmem>>, vector<1x32xf32>
      %24 = vector.broadcast %23 : vector<1x32xf32> to vector<16x32xf32>
      %25 = arith.addf %22, %24 : vector<16x32xf32>
      %c0_23 = arith.constant 0 : index
      %c0_24 = arith.constant 0 : index
      %26 = vector.load %arg3[%c0_23, %c0_24] : memref<16x32xbf16, #tpu.memory_space<vmem>>, vector<16x32xbf16>
      %27 = arith.extf %26 : vector<16x32xbf16> to vector<16x32xf32>
      %28 = arith.addf %27, %25 : vector<16x32xf32>
      %c0_25 = arith.constant 0 : index
      %c0_26 = arith.constant 0 : index
      %29 = vector.load %arg6[%c0_25, %c0_26] : memref<1x32xf32, #tpu.memory_space<vmem>>, vector<1x32xf32>
      %c0_27 = arith.constant 0 : index
      %c0_28 = arith.constant 0 : index
      %30 = vector.load %arg7[%c0_27, %c0_28] : memref<1x32xf32, #tpu.memory_space<vmem>>, vector<1x32xf32>
      %cst_29 = arith.constant dense<0.000000e+00> : vector<16xf32>
      %31 = vector.multi_reduction <add>, %28, %cst_29 [1] : vector<16x32xf32> to vector<16xf32>
      %32 = vector.shape_cast %31 : vector<16xf32> to vector<16x1xf32>
      %cst_30 = arith.constant 3.200000e+01 : f32
      %33 = vector.broadcast %cst_30 : f32 to vector<16x1xf32>
      %34 = arith.divf %32, %33 : vector<16x1xf32>
      %35 = vector.broadcast %34 : vector<16x1xf32> to vector<16x32xf32>
      %36 = arith.subf %28, %35 : vector<16x32xf32>
      %37 = arith.mulf %36, %36 : vector<16x32xf32>
      %cst_31 = arith.constant dense<0.000000e+00> : vector<16xf32>
      %38 = vector.multi_reduction <add>, %37, %cst_31 [1] : vector<16x32xf32> to vector<16xf32>
      %39 = vector.shape_cast %38 : vector<16xf32> to vector<16x1xf32>
      %cst_32 = arith.constant 3.200000e+01 : f32
      %40 = vector.broadcast %cst_32 : f32 to vector<16x1xf32>
      %41 = arith.divf %39, %40 : vector<16x1xf32>
      %42 = vector.broadcast %34 : vector<16x1xf32> to vector<16x32xf32>
      %43 = arith.subf %28, %42 : vector<16x32xf32>
      %cst_33 = arith.constant 9.99999974E-6 : f32
      %44 = vector.broadcast %cst_33 : f32 to vector<16x1xf32>
      %45 = arith.addf %41, %44 : vector<16x1xf32>
      %46 = math.rsqrt %45 : vector<16x1xf32>
      %47 = vector.broadcast %46 : vector<16x1xf32> to vector<16x32xf32>
      %48 = arith.mulf %43, %47 : vector<16x32xf32>
      %49 = vector.broadcast %29 : vector<1x32xf32> to vector<16x32xf32>
      %50 = arith.mulf %48, %49 : vector<16x32xf32>
      %51 = vector.broadcast %30 : vector<1x32xf32> to vector<16x32xf32>
      %52 = arith.addf %50, %51 : vector<16x32xf32>
      %53 = arith.truncf %52 : vector<16x32xf32> to vector<16x32xbf16>
      %c0_34 = arith.constant 0 : index
      %c0_35 = arith.constant 0 : index
      %54 = vector.load %arg15[%c0_34, %c0_35] : memref<16x32xbf16, #tpu.memory_space<vmem>>, vector<16x32xbf16>
      tpu.vector_store %arg15[%c0_34, %c0_35], %53 {strides = array<i32>} : memref<16x32xbf16, #tpu.memory_space<vmem>>, vector<16x32xbf16>,
      %cst_36 = arith.constant 0.000000e+00 : f32
      %55 = vector.broadcast %cst_36 : f32 to vector<16x32xf32>
      %c0_37 = arith.constant 0 : index
      %c0_38 = arith.constant 0 : index
      %56 = vector.load %arg16[%c0_37, %c0_38] : memref<16x32xf32, #tpu.memory_space<vmem>>, vector<16x32xf32>
      tpu.vector_store %arg16[%c0_37, %c0_38], %55 {strides = array<i32>} : memref<16x32xf32, #tpu.memory_space<vmem>>, vector<16x32xf32>,
    } else {
    }
    %c0 = arith.constant 0 : index
    %c0_1 = arith.constant 0 : index
    %3 = vector.load %arg15[%c0, %c0_1] : memref<16x32xbf16, #tpu.memory_space<vmem>>, vector<16x32xbf16>
    %c0_2 = arith.constant 0 : index
    %c0_3 = arith.constant 0 : index
    %4 = vector.load %arg8[%c0_2, %c0_3] : memref<32x64xbf16, #tpu.memory_space<vmem>>, vector<32x64xbf16>
    %cst = arith.constant dense<0.000000e+00> : vector<16x64xf32>
    %5 = tpu.matmul %3, %4, %cst {dimension_numbers = #tpu.dot_dimension_numbers<[1], [0], [0], [1], [0, 0, 1, 1], [], []>} : vector<16x32xbf16>, vector<32x64xbf16>, vector<16x64xf32> -> vector<16x64xf32>
    %c0_4 = arith.constant 0 : index
    %c0_5 = arith.constant 0 : index
    %6 = vector.load %arg9[%c0_4, %c0_5] : memref<1x64xf32, #tpu.memory_space<vmem>>, vector<1x64xf32>
    %7 = vector.broadcast %6 : vector<1x64xf32> to vector<16x64xf32>
    %8 = arith.addf %5, %7 : vector<16x64xf32>
    %cst_6 = arith.constant 0.000000e+00 : f32
    %9 = vector.broadcast %cst_6 : f32 to vector<16x64xf32>
    %10 = arith.maximumf %8, %9 : vector<16x64xf32>
    %c0_7 = arith.constant 0 : index
    %c0_8 = arith.constant 0 : index
    %11 = vector.load %arg16[%c0_7, %c0_8] : memref<16x32xf32, #tpu.memory_space<vmem>>, vector<16x32xf32>
    %12 = arith.truncf %10 : vector<16x64xf32> to vector<16x64xbf16>
    %c0_9 = arith.constant 0 : index
    %c0_10 = arith.constant 0 : index
    %13 = vector.load %arg10[%c0_9, %c0_10] : memref<64x32xbf16, #tpu.memory_space<vmem>>, vector<64x32xbf16>
    %cst_11 = arith.constant dense<0.000000e+00> : vector<16x32xf32>
    %14 = tpu.matmul %12, %13, %cst_11 {dimension_numbers = #tpu.dot_dimension_numbers<[1], [0], [0], [1], [0, 0, 1, 1], [], []>} : vector<16x64xbf16>, vector<64x32xbf16>, vector<16x32xf32> -> vector<16x32xf32>
    %15 = arith.addf %11, %14 : vector<16x32xf32>
    %c0_12 = arith.constant 0 : index
    %c0_13 = arith.constant 0 : index
    %16 = vector.load %arg16[%c0_12, %c0_13] : memref<16x32xf32, #tpu.memory_space<vmem>>, vector<16x32xf32>
    tpu.vector_store %arg16[%c0_12, %c0_13], %15 {strides = array<i32>} : memref<16x32xf32, #tpu.memory_space<vmem>>, vector<16x32xf32>,
    %c0_i32_14 = arith.constant 0 : i32
    %17 = arith.cmpi eq, %arg1, %c0_i32_14 : i32
    %18 = arith.extui %17 : i1 to i32
    %c0_i32_15 = arith.constant 0 : i32
    %19 = arith.cmpi ne, %18, %c0_i32_15 : i32
    scf.if %19 {
      %c0_16 = arith.constant 0 : index
      %c0_17 = arith.constant 0 : index
      %20 = vector.load %arg16[%c0_16, %c0_17] : memref<16x32xf32, #tpu.memory_space<vmem>>, vector<16x32xf32>
      %c0_18 = arith.constant 0 : index
      %c0_19 = arith.constant 0 : index
      %21 = vector.load %arg11[%c0_18, %c0_19] : memref<1x32xf32, #tpu.memory_space<vmem>>, vector<1x32xf32>
      %22 = vector.broadcast %21 : vector<1x32xf32> to vector<16x32xf32>
      %23 = arith.addf %20, %22 : vector<16x32xf32>
      %c0_20 = arith.constant 0 : index
      %c0_21 = arith.constant 0 : index
      %24 = vector.load %arg15[%c0_20, %c0_21] : memref<16x32xbf16, #tpu.memory_space<vmem>>, vector<16x32xbf16>
      %25 = arith.extf %24 : vector<16x32xbf16> to vector<16x32xf32>
      %26 = arith.addf %25, %23 : vector<16x32xf32>
      %c0_22 = arith.constant 0 : index
      %c0_23 = arith.constant 0 : index
      %27 = vector.load %arg12[%c0_22, %c0_23] : memref<1x32xf32, #tpu.memory_space<vmem>>, vector<1x32xf32>
      %c0_24 = arith.constant 0 : index
      %c0_25 = arith.constant 0 : index
      %28 = vector.load %arg13[%c0_24, %c0_25] : memref<1x32xf32, #tpu.memory_space<vmem>>, vector<1x32xf32>
      %cst_26 = arith.constant dense<0.000000e+00> : vector<16xf32>
      %29 = vector.multi_reduction <add>, %26, %cst_26 [1] : vector<16x32xf32> to vector<16xf32>
      %30 = vector.shape_cast %29 : vector<16xf32> to vector<16x1xf32>
      %cst_27 = arith.constant 3.200000e+01 : f32
      %31 = vector.broadcast %cst_27 : f32 to vector<16x1xf32>
      %32 = arith.divf %30, %31 : vector<16x1xf32>
      %33 = vector.broadcast %32 : vector<16x1xf32> to vector<16x32xf32>
      %34 = arith.subf %26, %33 : vector<16x32xf32>
      %35 = arith.mulf %34, %34 : vector<16x32xf32>
      %cst_28 = arith.constant dense<0.000000e+00> : vector<16xf32>
      %36 = vector.multi_reduction <add>, %35, %cst_28 [1] : vector<16x32xf32> to vector<16xf32>
      %37 = vector.shape_cast %36 : vector<16xf32> to vector<16x1xf32>
      %cst_29 = arith.constant 3.200000e+01 : f32
      %38 = vector.broadcast %cst_29 : f32 to vector<16x1xf32>
      %39 = arith.divf %37, %38 : vector<16x1xf32>
      %40 = vector.broadcast %32 : vector<16x1xf32> to vector<16x32xf32>
      %41 = arith.subf %26, %40 : vector<16x32xf32>
      %cst_30 = arith.constant 9.99999974E-6 : f32
      %42 = vector.broadcast %cst_30 : f32 to vector<16x1xf32>
      %43 = arith.addf %39, %42 : vector<16x1xf32>
      %44 = math.rsqrt %43 : vector<16x1xf32>
      %45 = vector.broadcast %44 : vector<16x1xf32> to vector<16x32xf32>
      %46 = arith.mulf %41, %45 : vector<16x32xf32>
      %47 = vector.broadcast %27 : vector<1x32xf32> to vector<16x32xf32>
      %48 = arith.mulf %46, %47 : vector<16x32xf32>
      %49 = vector.broadcast %28 : vector<1x32xf32> to vector<16x32xf32>
      %50 = arith.addf %48, %49 : vector<16x32xf32>
      %c0_31 = arith.constant 0 : index
      %c0_32 = arith.constant 0 : index
      %51 = vector.load %arg14[%c0_31, %c0_32] : memref<16x32xf32, #tpu.memory_space<vmem>>, vector<16x32xf32>
      tpu.vector_store %arg14[%c0_31, %c0_32], %50 {strides = array<i32>} : memref<16x32xf32, #tpu.memory_space<vmem>>, vector<16x32xf32>,
    } else {
    }
    return
  }
  func.func @transform_0(%arg0: i32, %arg1: i32) -> (i32, i32) {
    %c0_i32 = arith.constant 0 : i32
    %c0_i32_0 = arith.constant 0 : i32
    return %arg0, %c0_i32 : i32, i32
  }
  func.func @transform_1(%arg0: i32, %arg1: i32) -> (i32, i32) {
    %c0_i32 = arith.constant 0 : i32
    %c0_i32_0 = arith.constant 0 : i32
    return %arg0, %c0_i32 : i32, i32
  }
  func.func @transform_2(%arg0: i32, %arg1: i32) -> (i32, i32) {
    %c0_i32 = arith.constant 0 : i32
    %c0_i32_0 = arith.constant 0 : i32
    %c0_i32_1 = arith.constant 0 : i32
    return %c0_i32, %c0_i32_0 : i32, i32
  }
  func.func @transform_3(%arg0: i32, %arg1: i32) -> (i32, i32) {
    %c0_i32 = arith.constant 0 : i32
    %c0_i32_0 = arith.constant 0 : i32
    %c0_i32_1 = arith.constant 0 : i32
    return %c0_i32, %c0_i32_0 : i32, i32
  }
  func.func @transform_4(%arg0: i32, %arg1: i32) -> (i32, i32) {
    %c0_i32 = arith.constant 0 : i32
    %c0_i32_0 = arith.constant 0 : i32
    %c0_i32_1 = arith.constant 0 : i32
    return %c0_i32, %c0_i32_0 : i32, i32
  }
  func.func @transform_5(%arg0: i32, %arg1: i32) -> (i32, i32) {
    %c0_i32 = arith.constant 0 : i32
    %c0_i32_0 = arith.constant 0 : i32
    %c0_i32_1 = arith.constant 0 : i32
    return %c0_i32, %c0_i32_0 : i32, i32
  }
  func.func @transform_6(%arg0: i32, %arg1: i32) -> (i32, i32) {
    %c0_i32 = arith.constant 0 : i32
    %c0_i32_0 = arith.constant 0 : i32
    return %c0_i32, %arg1 : i32, i32
  }
  func.func @transform_7(%arg0: i32, %arg1: i32) -> (i32, i32) {
    %c0_i32 = arith.constant 0 : i32
    %c0_i32_0 = arith.constant 0 : i32
    return %c0_i32, %arg1 : i32, i32
  }
  func.func @transform_8(%arg0: i32, %arg1: i32) -> (i32, i32) {
    %c0_i32 = arith.constant 0 : i32
    %c0_i32_0 = arith.constant 0 : i32
    return %arg1, %c0_i32 : i32, i32
  }
  func.func @transform_9(%arg0: i32, %arg1: i32) -> (i32, i32) {
    %c0_i32 = arith.constant 0 : i32
    %c0_i32_0 = arith.constant 0 : i32
    %c0_i32_1 = arith.constant 0 : i32
    return %c0_i32, %c0_i32_0 : i32, i32
  }
  func.func @transform_10(%arg0: i32, %arg1: i32) -> (i32, i32) {
    %c0_i32 = arith.constant 0 : i32
    %c0_i32_0 = arith.constant 0 : i32
    %c0_i32_1 = arith.constant 0 : i32
    return %c0_i32, %c0_i32_0 : i32, i32
  }
  func.func @transform_11(%arg0: i32, %arg1: i32) -> (i32, i32) {
    %c0_i32 = arith.constant 0 : i32
    %c0_i32_0 = arith.constant 0 : i32
    %c0_i32_1 = arith.constant 0 : i32
    return %c0_i32, %c0_i32_0 : i32, i32
  }
  func.func @transform_12(%arg0: i32, %arg1: i32) -> (i32, i32) {
    %c0_i32 = arith.constant 0 : i32
    %c0_i32_0 = arith.constant 0 : i32
    return %arg0, %c0_i32 : i32, i32
  }
}

</mosaic_0001>

<llo_original>
// kernel: encoder_forward.6
$region0: #{encoder_forward.6}
  #allocation0 [shape = 'u32[]', space=smem, size = 0x4, offset = 0x4, fixed_abs, tag = 'smem constant byte address 0x4 - core index']
  #allocation1 [shape = 'u32[72,128]{1,0:T(1,128)}', space=vmem, size = 0x9000, scoped, tag = 'internal scratch']
  %s0 = inlined_call_operand.vmem [shape: bf16[16,32], index: 0, kind: input, shape index: {}]
  %s1 = inlined_call_operand.hbm [shape: bf16[3,32,32], index: 1, kind: input, shape index: {}]
  %s2 = inlined_call_operand.vmem [shape: f32[3,1,32], index: 2, kind: input, shape index: {}]
  %s3 = inlined_call_operand.vmem [shape: bf16[3,16,32], index: 3, kind: output, shape index: {}]
  %s4 = sld [smem:[#allocation0]]
  $region49: #{encoder_forward.6} parent=0
    _
  %s6 = ssub.s32 1, %s4
  %s7 = scalar_select 0, %s6, %s4
  $region1: #{encoder_forward.6} parent=0
    #allocation2 [shape = 'u8[16384]{0}', space=vmem, size = 0x4000, scoped, tag = 'input window, operand 1']
    #allocation3 [shape = 's32[2]{0}', space=sflag, size = 0x8, scoped, tag = 'scoped memory for encoder_forward.6']
    %8 = vsyncpa [#allocation3], 0
    %s9 = scalar_lea.sflag [#allocation3], 1
    %10 = vsyncpa %s9, 0
    loop: start=0, step=1, limit=5
    $region2: #{encoder_forward.6} parent=1 // loop_pre_header
      _
    $region3: #{encoder_forward.6} parent=1 // loop_header
      %s12 = sphi 0, %s16
      %p13 = scmp.ge.s32.totalorder %s12, 5
      %s19 = sphi 0, %s31
      %s20 = sphi 0, %s27
      %s21 = sphi 0, %s19
      %s22 = sphi 0, %s20
      %s23 = sphi 0, %s21
      %s24 = sphi 0, %s22
      %s34 = sphi 0, %s36
      %s37 = sphi 0, %s34
      %s38 = sphi 0, %s37
      %s54 = sphi 0, %s38
      %s60 = sphi 0, %s62
      %s63 = sphi 0, %s60
      %s64 = sphi 0, %s63
      %s80 = sphi 0, %s64
      %s86 = sphi 0, %s88
      %s89 = sphi 0, %s86
      %s90 = sphi 0, %s89
      %s106 = sphi 0, %s90
      %s114 = sphi 0, %s116
      %s117 = sphi 0, %s114
      %s118 = sphi 0, %s117
      %s134 = sphi 0, %s118
    $region4: #{encoder_forward.6} parent=1 // loop_header_branch
      %15 = sbr.rel (%p13) target = $region8
    $region5: #{encoder_forward.6} parent=1 // loop_body
      %s17 = ssub.s32 %s12, 1
      %s18 = ssub.s32 %s12, 2
      %s25 = sadd.s32 1, %s20
      %p26 = scmp.ge.s32.totalorder %s25, 3
      %s27 = scalar_select %p26, 0, %s25
      %s28 = sadd.s32 1, %s19
      %s29 = scalar_select %p26, %s28, %s19
      %p30 = scmp.ge.s32.totalorder %s29, 1
      %s31 = scalar_select %p30, 0, %s29
      %s32 = ssub.s32 %s19, %s31
      %p33 = scmp.eq.s32.totalorder %s32, 0
      %s35 = sadd.s32 %s34, 1
      %s36 = scalar_select %p33, %s34, %s35
      %p39 = pneg %p33
      %p40 = scmp.eq.s32.totalorder %s12, 2
      %p41 = por %p39, %p40
      %p42 = scmp.ne.s32.totalorder %s34, %s37
      %p43 = scmp.eq.s32.totalorder %s12, 0
      %p44 = por %p42, %p43
      %p45 = scmp.ne.s32.totalorder %s34, %s37
      %p46 = scmp.eq.s32.totalorder %s17, 2
      %p47 = por %p45, %p46
      %p48 = scmp.ne.s32.totalorder %s37, %s38
      %p49 = scmp.eq.s32.totalorder %s17, 0
      %p50 = por %p48, %p49
      %p51 = scmp.ne.s32.totalorder %s37, %s38
      %p52 = scmp.eq.s32.totalorder %s18, 2
      %p53 = por %p51, %p52
      %p55 = scmp.ne.s32.totalorder %s38, %s54
      %p56 = scmp.eq.s32.totalorder %s18, 0
      %p57 = por %p55, %p56
      %s58 = ssub.s32 %s20, %s27
      %p59 = scmp.eq.s32.totalorder %s58, 0
      %s61 = sadd.s32 %s60, 1
      %s62 = scalar_select %p59, %s60, %s61
      %p65 = pneg %p59
      %p66 = scmp.eq.s32.totalorder %s12, 2
      %p67 = por %p65, %p66
      %p68 = scmp.ne.s32.totalorder %s60, %s63
      %p69 = scmp.eq.s32.totalorder %s12, 0
      %p70 = por %p68, %p69
      %p71 = scmp.ne.s32.totalorder %s60, %s63
      %p72 = scmp.eq.s32.totalorder %s17, 2
      %p73 = por %p71, %p72
      %p74 = scmp.ne.s32.totalorder %s63, %s64
      %p75 = scmp.eq.s32.totalorder %s17, 0
      %p76 = por %p74, %p75
      %p77 = scmp.ne.s32.totalorder %s63, %s64
      %p78 = scmp.eq.s32.totalorder %s18, 2
      %p79 = por %p77, %p78
      %p81 = scmp.ne.s32.totalorder %s64, %s80
      %p82 = scmp.eq.s32.totalorder %s18, 0
      %p83 = por %p81, %p82
      %s84 = ssub.s32 %s20, %s27
      %p85 = scmp.eq.s32.totalorder %s84, 0
      %s87 = sadd.s32 %s86, 1
      %s88 = scalar_select %p85, %s86, %s87
      %p91 = pneg %p85
      %p92 = scmp.eq.s32.totalorder %s12, 2
      %p93 = por %p91, %p92
      %p94 = scmp.ne.s32.totalorder %s86, %s89
      %p95 = scmp.eq.s32.totalorder %s12, 0
      %p96 = por %p94, %p95
      %p97 = scmp.ne.s32.totalorder %s86, %s89
      %p98 = scmp.eq.s32.totalorder %s17, 2
      %p99 = por %p97, %p98
      %p100 = scmp.ne.s32.totalorder %s89, %s90
      %p101 = scmp.eq.s32.totalorder %s17, 0
      %p102 = por %p100, %p101
      %p103 = scmp.ne.s32.totalorder %s89, %s90
      %p104 = scmp.eq.s32.totalorder %s18, 2
      %p105 = por %p103, %p104
      %p107 = scmp.ne.s32.totalorder %s90, %s106
      %p108 = scmp.eq.s32.totalorder %s18, 0
      %p109 = por %p107, %p108
      %s110 = ssub.s32 %s20, %s27
      %s111 = ssub.s32 %s19, %s31
      %s112 = sor.u32 %s110, %s111
      %p113 = scmp.eq.s32.totalorder %s112, 0
      %s115 = sadd.s32 %s114, 1
      %s116 = scalar_select %p113, %s114, %s115
      %p119 = pneg %p113
      %p120 = scmp.eq.s32.totalorder %s12, 2
      %p121 = por %p119, %p120
      %p122 = scmp.ne.s32.totalorder %s114, %s117
      %p123 = scmp.eq.s32.totalorder %s12, 0
      %p124 = por %p122, %p123
      %p125 = scmp.ne.s32.totalorder %s114, %s117
      %p126 = scmp.eq.s32.totalorder %s17, 2
      %p127 = por %p125, %p126
      %p128 = scmp.ne.s32.totalorder %s117, %s118
      %p129 = scmp.eq.s32.totalorder %s17, 0
      %p130 = por %p128, %p129
      %p131 = scmp.ne.s32.totalorder %s117, %s118
      %p132 = scmp.eq.s32.totalorder %s18, 2
      %p133 = por %p131, %p132
      %p135 = scmp.ne.s32.totalorder %s118, %s134
      %p136 = scmp.eq.s32.totalorder %s18, 0
      %p137 = por %p135, %p136
      %p138 = scmp.le.s32.totalorder 1, %s12
      %p139 = scmp.lt.s32.totalorder %s12, 4
      %p140 = pnand %p138, %p139
      %p141 = pneg %p140
      // Predicated region
      $region9: #{encoder_forward.6} parent=5 // pred_check
        _
      $region10: #{encoder_forward.6} parent=5 // pred_check_branch
        %143 = sbr.rel (%p140) target = $region12
      $region11: #{encoder_forward.6} parent=5 // pred_region
        %s144 = ssub.s32 %s12, 1
        // Predicated region
        $region13: #{encoder_forward.6} parent=11 // pred_check
          %p145 = pneg %p50
        $region14: #{encoder_forward.6} parent=11 // pred_check_branch
          %147 = sbr.rel (%p145) target = $region16
        $region15: #{encoder_forward.6} parent=11 // pred_region
          %s148 = smul.u32 2, %s21
          %p149 = scmp.lt.s32.totalorder %s148, 1
          %s150 = scalar_select %p149, %s148, 1
          %s151 = smul.addr %s150, 4
          %s152 = scalar_lea.vmem %s0, %s151
          %s153 = smul.u32 2, %s21
        $region16: #{encoder_forward.6} parent=11 // pred_fallthru
          _
      $region12: #{encoder_forward.6} parent=5 // pred_fallthru
        _
      %p154 = scmp.lt.s32.totalorder %s12, 3
      // Predicated region
      $region17: #{encoder_forward.6} parent=5 // pred_check
        %p155 = pneg %p154
      $region18: #{encoder_forward.6} parent=5 // pred_check_branch
        %157 = sbr.rel (%p155) target = $region20
      $region19: #{encoder_forward.6} parent=5 // pred_region
        // Predicated region
        $region21: #{encoder_forward.6} parent=19 // pred_check
          %p158 = pneg %p70
        $region22: #{encoder_forward.6} parent=19 // pred_check_branch
          %160 = sbr.rel (%p158) target = $region24
        $region23: #{encoder_forward.6} parent=19 // pred_region
          %s161 = sand.u32 %s60, 1
          %s162 = scalar_lea.sflag [#allocation3], %s161
          %s163 = sand.u32 %s60, 1
          %s164 = smul.addr %s163, 16
          %s165 = scalar_lea.vmem [#allocation2], %s164
          %167 = vsyncadd %s162, 0
          %s168 = smul.addr %s20, 4
          %s169 = smul.addr %s168, 4
          %s170 = scalar_lea.hbm %s1, %s169
          %s171 = sshll.u32 %s170, 4
          %s172 = int_to_ptr.hbm [resolvable:$true] %s171
          %s173 = sshll.u32 %s165, 4
          %s174 = int_to_ptr.vmem [resolvable:$true] %s173
          %179 = dma.hbm_to_vmem [thread:$0]  %s172, 256, %s174, %s162, 64, 64, 4
        $region24: #{encoder_forward.6} parent=19 // pred_fallthru
          _
        // Predicated region
        $region25: #{encoder_forward.6} parent=19 // pred_check
          %p180 = pneg %p96
        $region26: #{encoder_forward.6} parent=19 // pred_check_branch
          %182 = sbr.rel (%p180) target = $region28
        $region27: #{encoder_forward.6} parent=19 // pred_region
          %p183 = scmp.lt.s32.totalorder %s20, 2
          %s184 = scalar_select %p183, %s20, 2
          %s185 = scalar_lea.vmem %s2, %s184
        $region28: #{encoder_forward.6} parent=19 // pred_fallthru
          _
      $region20: #{encoder_forward.6} parent=5 // pred_fallthru
        _
      %p186 = scmp.le.s32.totalorder 1, %s12
      %p187 = scmp.lt.s32.totalorder %s12, 4
      %p188 = pnand %p186, %p187
      %p189 = pneg %p188
      // Predicated region
      $region29: #{encoder_forward.6} parent=5 // pred_check
        _
      $region30: #{encoder_forward.6} parent=5 // pred_check_branch
        %191 = sbr.rel (%p188) target = $region32
      $region31: #{encoder_forward.6} parent=5 // pred_region
        %s192 = ssub.s32 %s12, 1
        %s193 = sand.u32 %s63, 1
        %s194 = scalar_lea.sflag [#allocation3], %s193
        %s195 = sand.u32 %s63, 1
        %s196 = smul.addr %s195, 16
        %s197 = scalar_lea.vmem [#allocation2], %s196
        // Predicated region
        $region33: #{encoder_forward.6} parent=31 // pred_check
          %p198 = pneg %p76
        $region34: #{encoder_forward.6} parent=31 // pred_check_branch
          %200 = sbr.rel (%p198) target = $region36
        $region35: #{encoder_forward.6} parent=31 // pred_region
          %202 = dma.done %s194, 256
        $region36: #{encoder_forward.6} parent=31 // pred_fallthru
          _
        %s203 = smul.u32 2, %s21
        %p204 = scmp.lt.s32.totalorder %s203, 1
        %s205 = scalar_select %p204, %s203, 1
        %s206 = smul.addr %s205, 4
        %s207 = scalar_lea.vmem %s0, %s206
        %p208 = pneg %p50
        %p209 = pneg %p47
        %s210 = sand.u32 %s63, 1
        %s211 = scalar_lea.sflag [#allocation3], %s210
        %s212 = sand.u32 %s63, 1
        %s213 = smul.addr %s212, 16
        %s214 = scalar_lea.vmem [#allocation2], %s213
        %p215 = pneg %p76
        %p216 = pneg %p73
        %p217 = scmp.lt.s32.totalorder %s22, 2
        %s218 = scalar_select %p217, %s22, 2
        %s219 = scalar_lea.vmem %s2, %s218
        %p220 = pneg %p102
        %p221 = pneg %p99
        %p222 = pneg %p130
        %p223 = pneg %p127
        %s224 = smul.u32 2, %s21
        %p225 = scmp.lt.s32.totalorder %s22, 2
        %s226 = scalar_select %p225, %s22, 2
        %p227 = scmp.lt.s32.totalorder %s224, 1
        %s228 = scalar_select %p227, %s224, 1
        %s229 = smul.addr %s226, 2
        %s230 = sadd.s32 %s228, %s229
        %s231 = smul.addr %s230, 4
        %s232 = scalar_lea.vmem %s3, %s231
        %s233 = smul.u32 2, %s21
        %p234 = scmp.lt.s32.totalorder %s233, 1
        %s235 = scalar_select %p234, %s233, 1
        %s236 = smul.addr %s235, 4
        %s237 = scalar_lea.vmem %s0, %s236
        %s238 = smul.u32 2, %s21
        %p239 = scmp.lt.s32.totalorder %s22, 2
        %s240 = scalar_select %p239, %s22, 2
        %s241 = scalar_lea.vmem %s2, %s240
        %s242 = smul.u32 2, %s21
        %p243 = scmp.lt.s32.totalorder %s22, 2
        %s244 = scalar_select %p243, %s22, 2
        %p245 = scmp.lt.s32.totalorder %s242, 1
        %s246 = scalar_select %p245, %s242, 1
        %s247 = smul.addr %s244, 2
        %s248 = sadd.s32 %s246, %s247
        %s249 = smul.addr %s248, 4
        %s250 = scalar_lea.vmem %s3, %s249
        %s251 = smul.u32 2, %s21
        %v253 = vld [vmem:[%s237] sm:$0xf]
        %v254 = vld [vmem:[%s237 + $0x4] sm:$0xf]
        %v255 = vld [vmem:[%s197] sm:$0xf]
        %v256 = vld [vmem:[%s197 + $0x4] sm:$0xf]
        %v257 = vld [vmem:[%s197 + $0x8] sm:$0xf]
        %v258 = vld [vmem:[%s197 + $0xc] sm:$0xf]
        %v259 = vld [vmem:[%s241] sm:$0x1]
        %v261 = vperm.slane %v259, 0
        %v265 = vunpack.c.l.b16 %v253
        %v266 = vunpack.c.l.b16 %v254
        %v267 = vpack.c.b16 %v266, %v265
        %v272 = vunpack.c.l.b16 %v255
        %v273 = vunpack.c.l.b16 %v256
        %v274 = vunpack.c.l.b16 %v257
        %v275 = vunpack.c.l.b16 %v258
        %v276 = vpack.c.b16 %v273, %v272
        %v277 = vpack.c.b16 %v275, %v274
        %vm280 = vcmask 261120
        %v282 = vsel %vm280, %v267, 0
        %284 = vmatpush.bf16.msra.mxu0 0
        %285 = vmatpush.bf16.msra.mxu0 0
        %286 = vmatpush.bf16.msra.mxu0 0
        %287 = vmatpush.bf16.msra.mxu0 0
        %288 = vmatpush.bf16.msra.mxu0 0
        %289 = vmatpush.bf16.msra.mxu0 0
        %290 = vmatpush.bf16.msra.mxu0 %v277
        %291 = vmatpush.bf16.msra.mxu0 %v276
        %292 = vmatmul.bf16.gmra.mxu0 %v282
        %v293 = vpop.f32.mrf.mxu0
        %v294 = vadd.f32 %v261, %v293
        %v295 = vpop.f32.mrf.mxu0
        %v296 = vadd.f32 %v261, %v295
        %297 = vdwg.mxu0
        %v298 = vpack.c.bf16 %v294, %v294
        %v299 = vpack.c.bf16 %v296, %v296
        %vm300 = vcmask 257024
        %301 = vst.msk [vmem:[%s250] sm:$0xf] %vm300, %v298
        %302 = vst.msk [vmem:[%s250 + $0x4] sm:$0xf] %vm300, %v299
        %s303 = smul.u32 2, %s21
        %p304 = scmp.lt.s32.totalorder %s22, 2
        %s305 = scalar_select %p304, %s22, 2
        %p306 = scmp.lt.s32.totalorder %s303, 1
        %s307 = scalar_select %p306, %s303, 1
        %s308 = smul.addr %s305, 2
        %s309 = sadd.s32 %s307, %s308
        %s310 = smul.addr %s309, 4
        %s311 = scalar_lea.vmem %s3, %s310
        // Predicated region
        $region37: #{encoder_forward.6} parent=31 // pred_check
          %p312 = pneg %p127
        $region38: #{encoder_forward.6} parent=31 // pred_check_branch
          %314 = sbr.rel (%p312) target = $region40
        $region39: #{encoder_forward.6} parent=31 // pred_region
          %s315 = smul.u32 2, %s21
        $region40: #{encoder_forward.6} parent=31 // pred_fallthru
          _
      $region32: #{encoder_forward.6} parent=5 // pred_fallthru
        _
      %p316 = scmp.le.s32.totalorder 2, %s12
      // Predicated region
      $region41: #{encoder_forward.6} parent=5 // pred_check
        %p317 = pneg %p316
      $region42: #{encoder_forward.6} parent=5 // pred_check_branch
        %319 = sbr.rel (%p317) target = $region44
      $region43: #{encoder_forward.6} parent=5 // pred_region
        %s320 = ssub.s32 %s12, 2
        // Predicated region
        $region45: #{encoder_forward.6} parent=43 // pred_check
          %p321 = pneg %p133
        $region46: #{encoder_forward.6} parent=43 // pred_check_branch
          %323 = sbr.rel (%p321) target = $region48
        $region47: #{encoder_forward.6} parent=43 // pred_region
          %s324 = smul.u32 2, %s23
          %p325 = scmp.lt.s32.totalorder %s24, 2
          %s326 = scalar_select %p325, %s24, 2
          %p327 = scmp.lt.s32.totalorder %s324, 1
          %s328 = scalar_select %p327, %s324, 1
          %s329 = smul.addr %s326, 2
          %s330 = sadd.s32 %s328, %s329
          %s331 = smul.addr %s330, 4
          %s332 = scalar_lea.vmem %s3, %s331
        $region48: #{encoder_forward.6} parent=43 // pred_fallthru
          _
      $region44: #{encoder_forward.6} parent=5 // pred_fallthru
        _
    $region6: #{encoder_forward.6} parent=1 // loop_footer
      %s16 = sadd.s32 1, %s12
    $region7: #{encoder_forward.6} parent=1 // loop_footer_branch
      %11 = sbr.rel target = $region3
    $region8: #{encoder_forward.6} parent=1 // loop_exit
      _
    %333 = vsyncpa [#allocation3], 1
    %s334 = scalar_lea.sflag [#allocation3], 1
    %335 = vsyncpa %s334, 1

// kernel: encoder_forward.7
$region0: #{encoder_forward.7}
  #allocation0 [shape = 'u32[]', space=smem, size = 0x4, offset = 0x4, fixed_abs, tag = 'smem constant byte address 0x4 - core index']
  #allocation1 [shape = 'u32[72,128]{1,0:T(1,128)}', space=vmem, size = 0x9000, scoped, tag = 'internal scratch']
  %s0 = inlined_call_operand.vmem [shape: bf16[3,8,8,8], index: 0, kind: input, shape index: {}, may-alias: {0,1,2}]
  %s1 = inlined_call_operand.vmem [shape: bf16[3,8,8,8], index: 1, kind: input, shape index: {}, may-alias: {0,1,2}]
  %s2 = inlined_call_operand.vmem [shape: bf16[3,8,8,8], index: 2, kind: input, shape index: {}, may-alias: {0,1,2}]
  %s3 = inlined_call_operand.vmem [shape: bf16[8,8,8], index: 3, kind: output, shape index: {0}]
  %s4 = inlined_call_operand.hbm [shape: bf16[8,8,8], index: 4, kind: output, shape index: {1}]
  %5 = xla_tuple %s3, %s4
  %s6 = sld [smem:[#allocation0]]
  $region53: #{encoder_forward.7} parent=0
    _
  %s8 = ssub.s32 1, %s6
  %s9 = scalar_select 0, %s8, %s6
  $region1: #{encoder_forward.7} parent=0
    #allocation2 [shape = 'u8[4096]{0}', space=vmem, size = 0x1000, scoped, tag = 'output window, operand 1']
    #allocation3 [shape = 's32[2]{0}', space=sflag, size = 0x8, scoped, tag = 'scoped memory for encoder_forward.7']
    %10 = vsyncpa [#allocation3], 0
    %s11 = scalar_lea.sflag [#allocation3], 1
    %12 = vsyncpa %s11, 0
    loop: start=0, step=1, limit=10
    $region2: #{encoder_forward.7} parent=1 // loop_pre_header
      _
    $region3: #{encoder_forward.7} parent=1 // loop_header
      %s14 = sphi 0, %s18
      %p15 = scmp.ge.s32.totalorder %s14, 10
      %s21 = sphi 0, %s33
      %s22 = sphi 0, %s29
      %s23 = sphi 0, %s21
      %s24 = sphi 0, %s22
      %s25 = sphi 0, %s23
      %s26 = sphi 0, %s24
      %s38 = sphi 0, %s40
      %s41 = sphi 0, %s38
      %s42 = sphi 0, %s41
      %s58 = sphi 0, %s42
      %s64 = sphi 0, %s66
      %s67 = sphi 0, %s64
      %s68 = sphi 0, %s67
      %s84 = sphi 0, %s68
      %s90 = sphi 0, %s92
      %s93 = sphi 0, %s90
      %s94 = sphi 0, %s93
      %s110 = sphi 0, %s94
      %s118 = sphi 0, %s120
      %s121 = sphi 0, %s118
      %s122 = sphi 0, %s121
      %s138 = sphi 0, %s122
      %s146 = sphi 0, %s148
      %s149 = sphi 0, %s146
      %s150 = sphi 0, %s149
      %s166 = sphi 0, %s150
    $region4: #{encoder_forward.7} parent=1 // loop_header_branch
      %17 = sbr.rel (%p15) target = $region8
    $region5: #{encoder_forward.7} parent=1 // loop_body
      %s19 = ssub.s32 %s14, 1
      %s20 = ssub.s32 %s14, 2
      %s27 = sadd.s32 1, %s22
      %p28 = scmp.ge.s32.totalorder %s27, 1
      %s29 = scalar_select %p28, 0, %s27
      %s30 = sadd.s32 1, %s21
      %s31 = scalar_select %p28, %s30, %s21
      %p32 = scmp.ge.s32.totalorder %s31, 8
      %s33 = scalar_select %p32, 0, %s31
      %s34 = ssub.s32 %s21, %s33
      %s35 = ssub.s32 %s22, %s29
      %s36 = sor.u32 %s34, %s35
      %p37 = scmp.eq.s32.totalorder %s36, 0
      %s39 = sadd.s32 %s38, 1
      %s40 = scalar_select %p37, %s38, %s39
      %p43 = pneg %p37
      %p44 = scmp.eq.s32.totalorder %s14, 7
      %p45 = por %p43, %p44
      %p46 = scmp.ne.s32.totalorder %s38, %s41
      %p47 = scmp.eq.s32.totalorder %s14, 0
      %p48 = por %p46, %p47
      %p49 = scmp.ne.s32.totalorder %s38, %s41
      %p50 = scmp.eq.s32.totalorder %s19, 7
      %p51 = por %p49, %p50
      %p52 = scmp.ne.s32.totalorder %s41, %s42
      %p53 = scmp.eq.s32.totalorder %s19, 0
      %p54 = por %p52, %p53
      %p55 = scmp.ne.s32.totalorder %s41, %s42
      %p56 = scmp.eq.s32.totalorder %s20, 7
      %p57 = por %p55, %p56
      %p59 = scmp.ne.s32.totalorder %s42, %s58
      %p60 = scmp.eq.s32.totalorder %s20, 0
      %p61 = por %p59, %p60
      %s62 = ssub.s32 %s21, %s33
      %p63 = scmp.eq.s32.totalorder %s62, 0
      %s65 = sadd.s32 %s64, 1
      %s66 = scalar_select %p63, %s64, %s65
      %p69 = pneg %p63
      %p70 = scmp.eq.s32.totalorder %s14, 7
      %p71 = por %p69, %p70
      %p72 = scmp.ne.s32.totalorder %s64, %s67
      %p73 = scmp.eq.s32.totalorder %s14, 0
      %p74 = por %p72, %p73
      %p75 = scmp.ne.s32.totalorder %s64, %s67
      %p76 = scmp.eq.s32.totalorder %s19, 7
      %p77 = por %p75, %p76
      %p78 = scmp.ne.s32.totalorder %s67, %s68
      %p79 = scmp.eq.s32.totalorder %s19, 0
      %p80 = por %p78, %p79
      %p81 = scmp.ne.s32.totalorder %s67, %s68
      %p82 = scmp.eq.s32.totalorder %s20, 7
      %p83 = por %p81, %p82
      %p85 = scmp.ne.s32.totalorder %s68, %s84
      %p86 = scmp.eq.s32.totalorder %s20, 0
      %p87 = por %p85, %p86
      %s88 = ssub.s32 %s21, %s33
      %p89 = scmp.eq.s32.totalorder %s88, 0
      %s91 = sadd.s32 %s90, 1
      %s92 = scalar_select %p89, %s90, %s91
      %p95 = pneg %p89
      %p96 = scmp.eq.s32.totalorder %s14, 7
      %p97 = por %p95, %p96
      %p98 = scmp.ne.s32.totalorder %s90, %s93
      %p99 = scmp.eq.s32.totalorder %s14, 0
      %p100 = por %p98, %p99
      %p101 = scmp.ne.s32.totalorder %s90, %s93
      %p102 = scmp.eq.s32.totalorder %s19, 7
      %p103 = por %p101, %p102
      %p104 = scmp.ne.s32.totalorder %s93, %s94
      %p105 = scmp.eq.s32.totalorder %s19, 0
      %p106 = por %p104, %p105
      %p107 = scmp.ne.s32.totalorder %s93, %s94
      %p108 = scmp.eq.s32.totalorder %s20, 7
      %p109 = por %p107, %p108
      %p111 = scmp.ne.s32.totalorder %s94, %s110
      %p112 = scmp.eq.s32.totalorder %s20, 0
      %p113 = por %p111, %p112
      %s114 = ssub.s32 %s21, %s33
      %s115 = ssub.s32 %s22, %s29
      %s116 = sor.u32 %s114, %s115
      %p117 = scmp.eq.s32.totalorder %s116, 0
      %s119 = sadd.s32 %s118, 1
      %s120 = scalar_select %p117, %s118, %s119
      %p123 = pneg %p117
      %p124 = scmp.eq.s32.totalorder %s14, 7
      %p125 = por %p123, %p124
      %p126 = scmp.ne.s32.totalorder %s118, %s121
      %p127 = scmp.eq.s32.totalorder %s14, 0
      %p128 = por %p126, %p127
      %p129 = scmp.ne.s32.totalorder %s118, %s121
      %p130 = scmp.eq.s32.totalorder %s19, 7
      %p131 = por %p129, %p130
      %p132 = scmp.ne.s32.totalorder %s121, %s122
      %p133 = scmp.eq.s32.totalorder %s19, 0
      %p134 = por %p132, %p133
      %p135 = scmp.ne.s32.totalorder %s121, %s122
      %p136 = scmp.eq.s32.totalorder %s20, 7
      %p137 = por %p135, %p136
      %p139 = scmp.ne.s32.totalorder %s122, %s138
      %p140 = scmp.eq.s32.totalorder %s20, 0
      %p141 = por %p139, %p140
      %s142 = ssub.s32 %s21, %s33
      %s143 = ssub.s32 %s22, %s29
      %s144 = sor.u32 %s142, %s143
      %p145 = scmp.eq.s32.totalorder %s144, 0
      %s147 = sadd.s32 %s146, 1
      %s148 = scalar_select %p145, %s146, %s147
      %p151 = pneg %p145
      %p152 = scmp.eq.s32.totalorder %s14, 7
      %p153 = por %p151, %p152
      %p154 = scmp.ne.s32.totalorder %s146, %s149
      %p155 = scmp.eq.s32.totalorder %s14, 0
      %p156 = por %p154, %p155
      %p157 = scmp.ne.s32.totalorder %s146, %s149
      %p158 = scmp.eq.s32.totalorder %s19, 7
      %p159 = por %p157, %p158
      %p160 = scmp.ne.s32.totalorder %s149, %s150
      %p161 = scmp.eq.s32.totalorder %s19, 0
      %p162 = por %p160, %p161
      %p163 = scmp.ne.s32.totalorder %s149, %s150
      %p164 = scmp.eq.s32.totalorder %s20, 7
      %p165 = por %p163, %p164
      %p167 = scmp.ne.s32.totalorder %s150, %s166
      %p168 = scmp.eq.s32.totalorder %s20, 0
      %p169 = por %p167, %p168
      %p170 = scmp.le.s32.totalorder 1, %s14
      %p171 = scmp.lt.s32.totalorder %s14, 9
      %p172 = pnand %p170, %p171
      %p173 = pneg %p172
      // Predicated region
      $region9: #{encoder_forward.7} parent=5 // pred_check
        _
      $region10: #{encoder_forward.7} parent=5 // pred_check_branch
        %175 = sbr.rel (%p172) target = $region12
      $region11: #{encoder_forward.7} parent=5 // pred_region
        %s176 = ssub.s32 %s14, 1
      $region12: #{encoder_forward.7} parent=5 // pred_fallthru
        _
      %p177 = scmp.lt.s32.totalorder %s14, 8
      // Predicated region
      $region13: #{encoder_forward.7} parent=5 // pred_check
        %p178 = pneg %p177
      $region14: #{encoder_forward.7} parent=5 // pred_check_branch
        %180 = sbr.rel (%p178) target = $region16
      $region15: #{encoder_forward.7} parent=5 // pred_region
        // Predicated region
        $region17: #{encoder_forward.7} parent=15 // pred_check
          %p181 = pneg %p48
        $region18: #{encoder_forward.7} parent=15 // pred_check_branch
          %183 = sbr.rel (%p181) target = $region20
        $region19: #{encoder_forward.7} parent=15 // pred_region
          %p184 = scmp.lt.s32.totalorder %s21, 7
          %s185 = scalar_select %p184, %s21, 7
          %p186 = scmp.lt.s32.totalorder %s22, 0
          %s187 = scalar_select %p186, %s22, 0
          %s188 = sadd.s32 %s187, %s185
          %s189 = smul.addr %s188, 4
          %s190 = scalar_lea.vmem %s0, %s189
        $region20: #{encoder_forward.7} parent=15 // pred_fallthru
          _
        // Predicated region
        $region21: #{encoder_forward.7} parent=15 // pred_check
          %p191 = pneg %p74
        $region22: #{encoder_forward.7} parent=15 // pred_check_branch
          %193 = sbr.rel (%p191) target = $region24
        $region23: #{encoder_forward.7} parent=15 // pred_region
          %p194 = scmp.lt.s32.totalorder %s21, 7
          %s195 = scalar_select %p194, %s21, 7
          %s196 = sadd.s32 %s195, 8
          %s197 = smul.addr %s196, 4
          %s198 = scalar_lea.vmem %s1, %s197
        $region24: #{encoder_forward.7} parent=15 // pred_fallthru
          _
        // Predicated region
        $region25: #{encoder_forward.7} parent=15 // pred_check
          %p199 = pneg %p100
        $region26: #{encoder_forward.7} parent=15 // pred_check_branch
          %201 = sbr.rel (%p199) target = $region28
        $region27: #{encoder_forward.7} parent=15 // pred_region
          %p202 = scmp.lt.s32.totalorder %s21, 7
          %s203 = scalar_select %p202, %s21, 7
          %s204 = sadd.s32 %s203, 16
          %s205 = smul.addr %s204, 4
          %s206 = scalar_lea.vmem %s2, %s205
        $region28: #{encoder_forward.7} parent=15 // pred_fallthru
          _
      $region16: #{encoder_forward.7} parent=5 // pred_fallthru
        _
      %p207 = scmp.le.s32.totalorder 1, %s14
      %p208 = scmp.lt.s32.totalorder %s14, 9
      %p209 = pnand %p207, %p208
      %p210 = pneg %p209
      // Predicated region
      $region29: #{encoder_forward.7} parent=5 // pred_check
        _
      $region30: #{encoder_forward.7} parent=5 // pred_check_branch
        %212 = sbr.rel (%p209) target = $region32
      $region31: #{encoder_forward.7} parent=5 // pred_region
        %s213 = ssub.s32 %s14, 1
        %p214 = scmp.lt.s32.totalorder %s23, 7
        %s215 = scalar_select %p214, %s23, 7
        %p216 = scmp.lt.s32.totalorder %s24, 0
        %s217 = scalar_select %p216, %s24, 0
        %s218 = sadd.s32 %s217, %s215
        %s219 = smul.addr %s218, 4
        %s220 = scalar_lea.vmem %s0, %s219
        %p221 = pneg %p54
        %p222 = pneg %p51
        %p223 = scmp.lt.s32.totalorder %s23, 7
        %s224 = scalar_select %p223, %s23, 7
        %s225 = sadd.s32 %s224, 8
        %s226 = smul.addr %s225, 4
        %s227 = scalar_lea.vmem %s1, %s226
        %p228 = pneg %p80
        %p229 = pneg %p77
        %p230 = scmp.lt.s32.totalorder %s23, 7
        %s231 = scalar_select %p230, %s23, 7
        %s232 = sadd.s32 %s231, 16
        %s233 = smul.addr %s232, 4
        %s234 = scalar_lea.vmem %s2, %s233
        %p235 = pneg %p106
        %p236 = pneg %p103
        %p237 = pneg %p134
        %p238 = pneg %p131
        %p239 = scmp.lt.s32.totalorder %s23, 7
        %s240 = scalar_select %p239, %s23, 7
        %p241 = scmp.lt.s32.totalorder %s24, 0
        %s242 = scalar_select %p241, %s24, 0
        %s243 = sadd.s32 %s242, %s240
        %s244 = smul.addr %s243, 4
        %s245 = scalar_lea.vmem %s3, %s244
        %p246 = pneg %p162
        %p247 = pneg %p159
        %s248 = sand.u32 %s149, 1
        %s249 = scalar_lea.sflag [#allocation3], %s248
        %s250 = sand.u32 %s149, 1
        %s251 = smul.addr %s250, 4
        %s252 = scalar_lea.vmem [#allocation2], %s251
        %p253 = scmp.lt.s32.totalorder %s23, 7
        %s254 = scalar_select %p253, %s23, 7
        %p255 = scmp.lt.s32.totalorder %s24, 0
        %s256 = scalar_select %p255, %s24, 0
        %s257 = sadd.s32 %s256, %s254
        %s258 = smul.addr %s257, 4
        %s259 = scalar_lea.vmem %s0, %s258
        %p260 = scmp.lt.s32.totalorder %s23, 7
        %s261 = scalar_select %p260, %s23, 7
        %s262 = sadd.s32 %s261, 8
        %s263 = smul.addr %s262, 4
        %s264 = scalar_lea.vmem %s1, %s263
        %p265 = scmp.lt.s32.totalorder %s23, 7
        %s266 = scalar_select %p265, %s23, 7
        %s267 = sadd.s32 %s266, 16
        %s268 = smul.addr %s267, 4
        %s269 = scalar_lea.vmem %s2, %s268
        %p270 = scmp.lt.s32.totalorder %s23, 7
        %s271 = scalar_select %p270, %s23, 7
        %p272 = scmp.lt.s32.totalorder %s24, 0
        %s273 = scalar_select %p272, %s24, 0
        %s274 = sadd.s32 %s273, %s271
        %s275 = smul.addr %s274, 4
        %s276 = scalar_lea.vmem %s3, %s275
        %v278 = vld [vmem:[%s259] sm:$0xf]
        %v279 = vld [vmem:[%s264] sm:$0xf]
        %vm280 = vcmask 64512
        %v282 = vsel %vm280, %v278, 0
        %v285 = vsel %vm280, %v279, 0
        %287 = vmatpush.bf16.xpose.msra.mxu0 0
        %288 = vmatpush.bf16.xpose.msra.mxu0 0
        %289 = vmatpush.bf16.xpose.msra.mxu0 0
        %290 = vmatpush.bf16.xpose.msra.mxu0 0
        %291 = vmatpush.bf16.xpose.msra.mxu0 0
        %292 = vmatpush.bf16.xpose.msra.mxu0 0
        %293 = vmatpush.bf16.xpose.msra.mxu0 0
        %294 = vmatpush.bf16.xpose.msra.mxu0 %v285
        %295 = vmatmul.bf16.gmra.mxu0 %v282
        %v296 = vpop.f32.mrf.mxu0
        %v297 = vadd.f32 0.0, %v296
        %v298 = vpop.f32.mrf.mxu0
        %299 = vdwg.mxu0
        %v300 = vsel %vm280, %v297, -inf
        %301 = vmax.xlane.f32.xlu0 %v300
        %v302 = vpop.xlane.xlu0 %301
        %v303 = vsub.f32 %v297, %v302
        %v304 = vmul.f32 %v303, 1.442695
        %v305 = vpow.pop %v304
        %v306 = vsel %vm280, %v305, 0.0
        %307 = vadd.xlane.f32.xlu0 %v306
        %v308 = vpop.xlane.xlu0 %307
        %v309 = vrcp.pop %v308
        %v310 = vmul.f32 %v308, %v309
        %v311 = vsub.f32 1.0, %v310
        %v312 = vmul.f32 %v309, %v311
        %v313 = vadd.f32 %v309, %v312
        %vm314 = vweird.f32 %v308
        %vm315 = vweird.f32 %v309
        %vm316 = vmor %vm314, %vm315
        %v317 = vsel %vm316, %v309, %v313
        %v318 = vand.u32 2147483647, %v308
        %vm319 = vcmp.eq.f32.partialorder %v318, 8.507059e+37
        %v320 = vand.u32 %v308, 2147483648
        %v321 = vor.u32 1.1754944e-38, %v320
        %v322 = vsel %vm319, %v321, %v317
        %v323 = vmul.f32 %v305, %v322
        %v324 = vpack.c.bf16 %v323, %v323
        %vm325 = vcmask 60416
        %326 = vst.msk [vmem:[%s252] sm:$0xf] %vm325, %v324
        %v327 = vld [vmem:[%s269] sm:$0xf]
        %v329 = vsel %vm280, %v324, 0
        %vm331 = vcmask 1043456
        %v333 = vsel %vm331, %v327, 0
        %335 = vmatpush.bf16.msra.mxu0 0
        %336 = vmatpush.bf16.msra.mxu0 0
        %337 = vmatpush.bf16.msra.mxu0 0
        %338 = vmatpush.bf16.msra.mxu0 0
        %339 = vmatpush.bf16.msra.mxu0 0
        %340 = vmatpush.bf16.msra.mxu0 0
        %341 = vmatpush.bf16.msra.mxu0 0
        %342 = vmatpush.bf16.msra.mxu0 %v333
        %343 = vmatmul.bf16.gmra.mxu0 %v329
        %v344 = vpop.f32.mrf.mxu0
        %v345 = vadd.f32 0.0, %v344
        %v346 = vpop.f32.mrf.mxu0
        %347 = vdwg.mxu0
        %v348 = vpack.c.bf16 %v345, %v345
        %349 = vst.msk [vmem:[%s276] sm:$0xf] %vm325, %v348
        %p350 = scmp.lt.s32.totalorder %s23, 7
        %s351 = scalar_select %p350, %s23, 7
        %p352 = scmp.lt.s32.totalorder %s24, 0
        %s353 = scalar_select %p352, %s24, 0
        %s354 = sadd.s32 %s353, %s351
        %s355 = smul.addr %s354, 4
        %s356 = scalar_lea.vmem %s3, %s355
        %s357 = sand.u32 %s149, 1
        %s358 = scalar_lea.sflag [#allocation3], %s357
        %s359 = sand.u32 %s149, 1
        %s360 = smul.addr %s359, 4
        %s361 = scalar_lea.vmem [#allocation2], %s360
        // Predicated region
        $region33: #{encoder_forward.7} parent=31 // pred_check
          %p362 = pneg %p131
        $region34: #{encoder_forward.7} parent=31 // pred_check_branch
          %364 = sbr.rel (%p362) target = $region36
        $region35: #{encoder_forward.7} parent=31 // pred_region
          _
        $region36: #{encoder_forward.7} parent=31 // pred_fallthru
          _
        // Predicated region
        $region37: #{encoder_forward.7} parent=31 // pred_check
          %p365 = pneg %p159
        $region38: #{encoder_forward.7} parent=31 // pred_check_branch
          %367 = sbr.rel (%p365) target = $region40
        $region39: #{encoder_forward.7} parent=31 // pred_region
          %369 = vsyncadd %s358, 0
          %s370 = sadd.s32 %s24, %s23
          %s371 = smul.addr %s370, 4
          %s372 = scalar_lea.hbm %s4, %s371
          %s374 = sshll.u32 %s361, 4
          %s375 = int_to_ptr.vmem [resolvable:$true] %s374
          %s376 = sshll.u32 %s372, 4
          %s377 = int_to_ptr.hbm [resolvable:$true] %s376
          %379 = dma.vmem_to_hbm [thread:$0]  %s375, 64, %s377, %s358
        $region40: #{encoder_forward.7} parent=31 // pred_fallthru
          _
      $region32: #{encoder_forward.7} parent=5 // pred_fallthru
        _
      %p380 = scmp.le.s32.totalorder 2, %s14
      // Predicated region
      $region41: #{encoder_forward.7} parent=5 // pred_check
        %p381 = pneg %p380
      $region42: #{encoder_forward.7} parent=5 // pred_check_branch
        %383 = sbr.rel (%p381) target = $region44
      $region43: #{encoder_forward.7} parent=5 // pred_region
        %s384 = ssub.s32 %s14, 2
        // Predicated region
        $region45: #{encoder_forward.7} parent=43 // pred_check
          %p385 = pneg %p137
        $region46: #{encoder_forward.7} parent=43 // pred_check_branch
          %387 = sbr.rel (%p385) target = $region48
        $region47: #{encoder_forward.7} parent=43 // pred_region
          %p388 = scmp.lt.s32.totalorder %s25, 7
          %s389 = scalar_select %p388, %s25, 7
          %p390 = scmp.lt.s32.totalorder %s26, 0
          %s391 = scalar_select %p390, %s26, 0
          %s392 = sadd.s32 %s391, %s389
          %s393 = smul.addr %s392, 4
          %s394 = scalar_lea.vmem %s3, %s393
        $region48: #{encoder_forward.7} parent=43 // pred_fallthru
          _
        // Predicated region
        $region49: #{encoder_forward.7} parent=43 // pred_check
          %p395 = pneg %p165
        $region50: #{encoder_forward.7} parent=43 // pred_check_branch
          %397 = sbr.rel (%p395) target = $region52
        $region51: #{encoder_forward.7} parent=43 // pred_region
          %s398 = sand.u32 %s150, 1
          %s399 = scalar_lea.sflag [#allocation3], %s398
          %s400 = sand.u32 %s150, 1
          %s401 = smul.addr %s400, 4
          %s402 = scalar_lea.vmem [#allocation2], %s401
          %404 = dma.done %s399, 64
        $region52: #{encoder_forward.7} parent=43 // pred_fallthru
          _
      $region44: #{encoder_forward.7} parent=5 // pred_fallthru
        _
    $region6: #{encoder_forward.7} parent=1 // loop_footer
      %s18 = sadd.s32 1, %s14
    $region7: #{encoder_forward.7} parent=1 // loop_footer_branch
      %13 = sbr.rel target = $region3
    $region8: #{encoder_forward.7} parent=1 // loop_exit
      _
    %405 = vsyncpa [#allocation3], 1
    %s406 = scalar_lea.sflag [#allocation3], 1
    %407 = vsyncpa %s406, 1

// kernel: encoder_forward.9
$region0: #{encoder_forward.9}
  #allocation0 [shape = 'u32[]', space=smem, size = 0x4, offset = 0x4, fixed_abs, tag = 'smem constant byte address 0x4 - core index']
  #allocation1 [shape = 'u32[72,128]{1,0:T(1,128)}', space=vmem, size = 0x9000, scoped, tag = 'internal scratch']
  %s0 = inlined_call_operand.vmem [shape: bf16[16,32], index: 0, kind: input, shape index: {}]
  %s1 = inlined_call_operand.vmem [shape: bf16[3,32,32], index: 1, kind: input, shape index: {}]
  %s2 = inlined_call_operand.vmem [shape: f32[3,1,32], index: 2, kind: input, shape index: {}]
  %s3 = inlined_call_operand.vmem [shape: bf16[3,16,32], index: 3, kind: output, shape index: {}]
  %s4 = sld [smem:[#allocation0]]
  $region45: #{encoder_forward.9} parent=0
    _
  %s6 = ssub.s32 1, %s4
  %s7 = scalar_select 0, %s6, %s4
  loop: start=0, step=1, limit=5
  $region2: #{encoder_forward.9} parent=0 // loop_pre_header
    _
  $region3: #{encoder_forward.9} parent=0 // loop_header
    %s9 = sphi 0, %s13
    %p10 = scmp.ge.s32.totalorder %s9, 5
    %s16 = sphi 0, %s28
    %s17 = sphi 0, %s24
    %s18 = sphi 0, %s16
    %s19 = sphi 0, %s17
    %s20 = sphi 0, %s18
    %s21 = sphi 0, %s19
    %s31 = sphi 0, %s33
    %s34 = sphi 0, %s31
    %s35 = sphi 0, %s34
    %s51 = sphi 0, %s35
    %s57 = sphi 0, %s59
    %s60 = sphi 0, %s57
    %s61 = sphi 0, %s60
    %s77 = sphi 0, %s61
    %s83 = sphi 0, %s85
    %s86 = sphi 0, %s83
    %s87 = sphi 0, %s86
    %s103 = sphi 0, %s87
    %s111 = sphi 0, %s113
    %s114 = sphi 0, %s111
    %s115 = sphi 0, %s114
    %s131 = sphi 0, %s115
  $region4: #{encoder_forward.9} parent=0 // loop_header_branch
    %12 = sbr.rel (%p10) target = $region8
  $region5: #{encoder_forward.9} parent=0 // loop_body
    %s14 = ssub.s32 %s9, 1
    %s15 = ssub.s32 %s9, 2
    %s22 = sadd.s32 1, %s17
    %p23 = scmp.ge.s32.totalorder %s22, 3
    %s24 = scalar_select %p23, 0, %s22
    %s25 = sadd.s32 1, %s16
    %s26 = scalar_select %p23, %s25, %s16
    %p27 = scmp.ge.s32.totalorder %s26, 1
    %s28 = scalar_select %p27, 0, %s26
    %s29 = ssub.s32 %s16, %s28
    %p30 = scmp.eq.s32.totalorder %s29, 0
    %s32 = sadd.s32 %s31, 1
    %s33 = scalar_select %p30, %s31, %s32
    %p36 = pneg %p30
    %p37 = scmp.eq.s32.totalorder %s9, 2
    %p38 = por %p36, %p37
    %p39 = scmp.ne.s32.totalorder %s31, %s34
    %p40 = scmp.eq.s32.totalorder %s9, 0
    %p41 = por %p39, %p40
    %p42 = scmp.ne.s32.totalorder %s31, %s34
    %p43 = scmp.eq.s32.totalorder %s14, 2
    %p44 = por %p42, %p43
    %p45 = scmp.ne.s32.totalorder %s34, %s35
    %p46 = scmp.eq.s32.totalorder %s14, 0
    %p47 = por %p45, %p46
    %p48 = scmp.ne.s32.totalorder %s34, %s35
    %p49 = scmp.eq.s32.totalorder %s15, 2
    %p50 = por %p48, %p49
    %p52 = scmp.ne.s32.totalorder %s35, %s51
    %p53 = scmp.eq.s32.totalorder %s15, 0
    %p54 = por %p52, %p53
    %s55 = ssub.s32 %s17, %s24
    %p56 = scmp.eq.s32.totalorder %s55, 0
    %s58 = sadd.s32 %s57, 1
    %s59 = scalar_select %p56, %s57, %s58
    %p62 = pneg %p56
    %p63 = scmp.eq.s32.totalorder %s9, 2
    %p64 = por %p62, %p63
    %p65 = scmp.ne.s32.totalorder %s57, %s60
    %p66 = scmp.eq.s32.totalorder %s9, 0
    %p67 = por %p65, %p66
    %p68 = scmp.ne.s32.totalorder %s57, %s60
    %p69 = scmp.eq.s32.totalorder %s14, 2
    %p70 = por %p68, %p69
    %p71 = scmp.ne.s32.totalorder %s60, %s61
    %p72 = scmp.eq.s32.totalorder %s14, 0
    %p73 = por %p71, %p72
    %p74 = scmp.ne.s32.totalorder %s60, %s61
    %p75 = scmp.eq.s32.totalorder %s15, 2
    %p76 = por %p74, %p75
    %p78 = scmp.ne.s32.totalorder %s61, %s77
    %p79 = scmp.eq.s32.totalorder %s15, 0
    %p80 = por %p78, %p79
    %s81 = ssub.s32 %s17, %s24
    %p82 = scmp.eq.s32.totalorder %s81, 0
    %s84 = sadd.s32 %s83, 1
    %s85 = scalar_select %p82, %s83, %s84
    %p88 = pneg %p82
    %p89 = scmp.eq.s32.totalorder %s9, 2
    %p90 = por %p88, %p89
    %p91 = scmp.ne.s32.totalorder %s83, %s86
    %p92 = scmp.eq.s32.totalorder %s9, 0
    %p93 = por %p91, %p92
    %p94 = scmp.ne.s32.totalorder %s83, %s86
    %p95 = scmp.eq.s32.totalorder %s14, 2
    %p96 = por %p94, %p95
    %p97 = scmp.ne.s32.totalorder %s86, %s87
    %p98 = scmp.eq.s32.totalorder %s14, 0
    %p99 = por %p97, %p98
    %p100 = scmp.ne.s32.totalorder %s86, %s87
    %p101 = scmp.eq.s32.totalorder %s15, 2
    %p102 = por %p100, %p101
    %p104 = scmp.ne.s32.totalorder %s87, %s103
    %p105 = scmp.eq.s32.totalorder %s15, 0
    %p106 = por %p104, %p105
    %s107 = ssub.s32 %s17, %s24
    %s108 = ssub.s32 %s16, %s28
    %s109 = sor.u32 %s107, %s108
    %p110 = scmp.eq.s32.totalorder %s109, 0
    %s112 = sadd.s32 %s111, 1
    %s113 = scalar_select %p110, %s111, %s112
    %p116 = pneg %p110
    %p117 = scmp.eq.s32.totalorder %s9, 2
    %p118 = por %p116, %p117
    %p119 = scmp.ne.s32.totalorder %s111, %s114
    %p120 = scmp.eq.s32.totalorder %s9, 0
    %p121 = por %p119, %p120
    %p122 = scmp.ne.s32.totalorder %s111, %s114
    %p123 = scmp.eq.s32.totalorder %s14, 2
    %p124 = por %p122, %p123
    %p125 = scmp.ne.s32.totalorder %s114, %s115
    %p126 = scmp.eq.s32.totalorder %s14, 0
    %p127 = por %p125, %p126
    %p128 = scmp.ne.s32.totalorder %s114, %s115
    %p129 = scmp.eq.s32.totalorder %s15, 2
    %p130 = por %p128, %p129
    %p132 = scmp.ne.s32.totalorder %s115, %s131
    %p133 = scmp.eq.s32.totalorder %s15, 0
    %p134 = por %p132, %p133
    %p135 = scmp.le.s32.totalorder 1, %s9
    %p136 = scmp.lt.s32.totalorder %s9, 4
    %p137 = pnand %p135, %p136
    %p138 = pneg %p137
    // Predicated region
    $region9: #{encoder_forward.9} parent=5 // pred_check
      _
    $region10: #{encoder_forward.9} parent=5 // pred_check_branch
      %140 = sbr.rel (%p137) target = $region12
    $region11: #{encoder_forward.9} parent=5 // pred_region
      %s141 = ssub.s32 %s9, 1
      // Predicated region
      $region13: #{encoder_forward.9} parent=11 // pred_check
        %p142 = pneg %p47
      $region14: #{encoder_forward.9} parent=11 // pred_check_branch
        %144 = sbr.rel (%p142) target = $region16
      $region15: #{encoder_forward.9} parent=11 // pred_region
        %s145 = smul.u32 2, %s18
        %p146 = scmp.lt.s32.totalorder %s145, 1
        %s147 = scalar_select %p146, %s145, 1
        %s148 = smul.addr %s147, 4
        %s149 = scalar_lea.vmem %s0, %s148
        %s150 = smul.u32 2, %s18
      $region16: #{encoder_forward.9} parent=11 // pred_fallthru
        _
    $region12: #{encoder_forward.9} parent=5 // pred_fallthru
      _
    %p151 = scmp.lt.s32.totalorder %s9, 3
    // Predicated region
    $region17: #{encoder_forward.9} parent=5 // pred_check
      %p152 = pneg %p151
    $region18: #{encoder_forward.9} parent=5 // pred_check_branch
      %154 = sbr.rel (%p152) target = $region20
    $region19: #{encoder_forward.9} parent=5 // pred_region
      // Predicated region
      $region21: #{encoder_forward.9} parent=19 // pred_check
        %p155 = pneg %p67
      $region22: #{encoder_forward.9} parent=19 // pred_check_branch
        %157 = sbr.rel (%p155) target = $region24
      $region23: #{encoder_forward.9} parent=19 // pred_region
        %p158 = scmp.lt.s32.totalorder %s17, 2
        %s159 = scalar_select %p158, %s17, 2
        %s160 = smul.addr %s159, 4
        %s161 = smul.addr %s160, 4
        %s162 = scalar_lea.vmem %s1, %s161
      $region24: #{encoder_forward.9} parent=19 // pred_fallthru
        _
      // Predicated region
      $region25: #{encoder_forward.9} parent=19 // pred_check
        %p163 = pneg %p93
      $region26: #{encoder_forward.9} parent=19 // pred_check_branch
        %165 = sbr.rel (%p163) target = $region28
      $region27: #{encoder_forward.9} parent=19 // pred_region
        %p166 = scmp.lt.s32.totalorder %s17, 2
        %s167 = scalar_select %p166, %s17, 2
        %s168 = scalar_lea.vmem %s2, %s167
      $region28: #{encoder_forward.9} parent=19 // pred_fallthru
        _
    $region20: #{encoder_forward.9} parent=5 // pred_fallthru
      _
    %p169 = scmp.le.s32.totalorder 1, %s9
    %p170 = scmp.lt.s32.totalorder %s9, 4
    %p171 = pnand %p169, %p170
    %p172 = pneg %p171
    // Predicated region
    $region29: #{encoder_forward.9} parent=5 // pred_check
      _
    $region30: #{encoder_forward.9} parent=5 // pred_check_branch
      %174 = sbr.rel (%p171) target = $region32
    $region31: #{encoder_forward.9} parent=5 // pred_region
      %s175 = ssub.s32 %s9, 1
      %s176 = smul.u32 2, %s18
      %p177 = scmp.lt.s32.totalorder %s176, 1
      %s178 = scalar_select %p177, %s176, 1
      %s179 = smul.addr %s178, 4
      %s180 = scalar_lea.vmem %s0, %s179
      %p181 = pneg %p47
      %p182 = pneg %p44
      %p183 = scmp.lt.s32.totalorder %s19, 2
      %s184 = scalar_select %p183, %s19, 2
      %s185 = smul.addr %s184, 4
      %s186 = smul.addr %s185, 4
      %s187 = scalar_lea.vmem %s1, %s186
      %p188 = pneg %p73
      %p189 = pneg %p70
      %p190 = scmp.lt.s32.totalorder %s19, 2
      %s191 = scalar_select %p190, %s19, 2
      %s192 = scalar_lea.vmem %s2, %s191
      %p193 = pneg %p99
      %p194 = pneg %p96
      %p195 = pneg %p127
      %p196 = pneg %p124
      %s197 = smul.u32 2, %s18
      %p198 = scmp.lt.s32.totalorder %s19, 2
      %s199 = scalar_select %p198, %s19, 2
      %p200 = scmp.lt.s32.totalorder %s197, 1
      %s201 = scalar_select %p200, %s197, 1
      %s202 = smul.addr %s199, 2
      %s203 = sadd.s32 %s201, %s202
      %s204 = smul.addr %s203, 4
      %s205 = scalar_lea.vmem %s3, %s204
      %s206 = smul.u32 2, %s18
      %p207 = scmp.lt.s32.totalorder %s206, 1
      %s208 = scalar_select %p207, %s206, 1
      %s209 = smul.addr %s208, 4
      %s210 = scalar_lea.vmem %s0, %s209
      %s211 = smul.u32 2, %s18
      %p212 = scmp.lt.s32.totalorder %s19, 2
      %s213 = scalar_select %p212, %s19, 2
      %s214 = smul.addr %s213, 4
      %s215 = smul.addr %s214, 4
      %s216 = scalar_lea.vmem %s1, %s215
      %p217 = scmp.lt.s32.totalorder %s19, 2
      %s218 = scalar_select %p217, %s19, 2
      %s219 = scalar_lea.vmem %s2, %s218
      %s220 = smul.u32 2, %s18
      %p221 = scmp.lt.s32.totalorder %s19, 2
      %s222 = scalar_select %p221, %s19, 2
      %p223 = scmp.lt.s32.totalorder %s220, 1
      %s224 = scalar_select %p223, %s220, 1
      %s225 = smul.addr %s222, 2
      %s226 = sadd.s32 %s224, %s225
      %s227 = smul.addr %s226, 4
      %s228 = scalar_lea.vmem %s3, %s227
      %s229 = smul.u32 2, %s18
      %v231 = vld [vmem:[%s210] sm:$0xf]
      %v232 = vld [vmem:[%s210 + $0x4] sm:$0xf]
      %v233 = vld [vmem:[%s216] sm:$0xf]
      %v234 = vld [vmem:[%s216 + $0x4] sm:$0xf]
      %v235 = vld [vmem:[%s216 + $0x8] sm:$0xf]
      %v236 = vld [vmem:[%s216 + $0xc] sm:$0xf]
      %v237 = vld [vmem:[%s219] sm:$0x1]
      %v239 = vperm.slane %v237, 0
      %v243 = vunpack.c.l.b16 %v231
      %v244 = vunpack.c.l.b16 %v232
      %v245 = vpack.c.b16 %v244, %v243
      %v250 = vunpack.c.l.b16 %v233
      %v251 = vunpack.c.l.b16 %v234
      %v252 = vunpack.c.l.b16 %v235
      %v253 = vunpack.c.l.b16 %v236
      %v254 = vpack.c.b16 %v251, %v250
      %v255 = vpack.c.b16 %v253, %v252
      %vm258 = vcmask 261120
      %v260 = vsel %vm258, %v245, 0
      %262 = vmatpush.bf16.msra.mxu0 0
      %263 = vmatpush.bf16.msra.mxu0 0
      %264 = vmatpush.bf16.msra.mxu0 0
      %265 = vmatpush.bf16.msra.mxu0 0
      %266 = vmatpush.bf16.msra.mxu0 0
      %267 = vmatpush.bf16.msra.mxu0 0
      %268 = vmatpush.bf16.msra.mxu0 %v255
      %269 = vmatpush.bf16.msra.mxu0 %v254
      %270 = vmatmul.bf16.gmra.mxu0 %v260
      %v271 = vpop.f32.mrf.mxu0
      %v272 = vadd.f32 %v239, %v271
      %v273 = vpop.f32.mrf.mxu0
      %v274 = vadd.f32 %v239, %v273
      %275 = vdwg.mxu0
      %v276 = vpack.c.bf16 %v272, %v272
      %v277 = vpack.c.bf16 %v274, %v274
      %vm278 = vcmask 257024
      %279 = vst.msk [vmem:[%s228] sm:$0xf] %vm278, %v276
      %280 = vst.msk [vmem:[%s228 + $0x4] sm:$0xf] %vm278, %v277
      %s281 = smul.u32 2, %s18
      %p282 = scmp.lt.s32.totalorder %s19, 2
      %s283 = scalar_select %p282, %s19, 2
      %p284 = scmp.lt.s32.totalorder %s281, 1
      %s285 = scalar_select %p284, %s281, 1
      %s286 = smul.addr %s283, 2
      %s287 = sadd.s32 %s285, %s286
      %s288 = smul.addr %s287, 4
      %s289 = scalar_lea.vmem %s3, %s288
      // Predicated region
      $region33: #{encoder_forward.9} parent=31 // pred_check
        %p290 = pneg %p124
      $region34: #{encoder_forward.9} parent=31 // pred_check_branch
        %292 = sbr.rel (%p290) target = $region36
      $region35: #{encoder_forward.9} parent=31 // pred_region
        %s293 = smul.u32 2, %s18
      $region36: #{encoder_forward.9} parent=31 // pred_fallthru
        _
    $region32: #{encoder_forward.9} parent=5 // pred_fallthru
      _
    %p294 = scmp.le.s32.totalorder 2, %s9
    // Predicated region
    $region37: #{encoder_forward.9} parent=5 // pred_check
      %p295 = pneg %p294
    $region38: #{encoder_forward.9} parent=5 // pred_check_branch
      %297 = sbr.rel (%p295) target = $region40
    $region39: #{encoder_forward.9} parent=5 // pred_region
      %s298 = ssub.s32 %s9, 2
      // Predicated region
      $region41: #{encoder_forward.9} parent=39 // pred_check
        %p299 = pneg %p130
      $region42: #{encoder_forward.9} parent=39 // pred_check_branch
        %301 = sbr.rel (%p299) target = $region44
      $region43: #{encoder_forward.9} parent=39 // pred_region
        %s302 = smul.u32 2, %s20
        %p303 = scmp.lt.s32.totalorder %s21, 2
        %s304 = scalar_select %p303, %s21, 2
        %p305 = scmp.lt.s32.totalorder %s302, 1
        %s306 = scalar_select %p305, %s302, 1
        %s307 = smul.addr %s304, 2
        %s308 = sadd.s32 %s306, %s307
        %s309 = smul.addr %s308, 4
        %s310 = scalar_lea.vmem %s3, %s309
      $region44: #{encoder_forward.9} parent=39 // pred_fallthru
        _
    $region40: #{encoder_forward.9} parent=5 // pred_fallthru
      _
  $region6: #{encoder_forward.9} parent=0 // loop_footer
    %s13 = sadd.s32 1, %s9
  $region7: #{encoder_forward.9} parent=0 // loop_footer_branch
    %8 = sbr.rel target = $region3
  $region8: #{encoder_forward.9} parent=0 // loop_exit
    _

// kernel: encoder_forward.8
$region0: #{encoder_forward.8}
  #allocation0 [shape = 'u32[]', space=smem, size = 0x4, offset = 0x4, fixed_abs, tag = 'smem constant byte address 0x4 - core index']
  #allocation1 [shape = 'u32[72,128]{1,0:T(1,128)}', space=vmem, size = 0x9000, scoped, tag = 'internal scratch']
  #allocation2 [shape = 'bf16[16,32]{1,0:T(8,128)(2,1)}', space=vmem, size = 0x1000, scoped, tag = 'scratch operand']
  #allocation3 [shape = 'f32[16,32]{1,0:T(8,128)}', space=vmem, size = 0x2000, scoped, tag = 'scratch operand']
  %s0 = inlined_call_operand.vmem [shape: bf16[16,32], index: 0, kind: input, shape index: {}]
  %s1 = inlined_call_operand.vmem [shape: bf16[16,32], index: 1, kind: input, shape index: {}]
  %s2 = inlined_call_operand.vmem [shape: bf16[32,32], index: 2, kind: input, shape index: {}]
  %s3 = inlined_call_operand.vmem [shape: f32[1,32], index: 3, kind: input, shape index: {}]
  %s4 = inlined_call_operand.vmem [shape: f32[1,32], index: 4, kind: input, shape index: {}]
  %s5 = inlined_call_operand.vmem [shape: f32[1,32], index: 5, kind: input, shape index: {}]
  %s6 = inlined_call_operand.vmem [shape: bf16[32,64], index: 6, kind: input, shape index: {}]
  %s7 = inlined_call_operand.vmem [shape: f32[1,64], index: 7, kind: input, shape index: {}]
  %s8 = inlined_call_operand.vmem [shape: bf16[64,32], index: 8, kind: input, shape index: {}]
  %s9 = inlined_call_operand.vmem [shape: f32[1,32], index: 9, kind: input, shape index: {}]
  %s10 = inlined_call_operand.vmem [shape: f32[1,32], index: 10, kind: input, shape index: {}]
  %s11 = inlined_call_operand.vmem [shape: f32[1,32], index: 11, kind: input, shape index: {}]
  %s12 = inlined_call_operand.vmem [shape: bf16[16,32], index: 12, kind: output, shape index: {}]
  %s13 = sld [smem:[#allocation0]]
  $region66: #{encoder_forward.8} parent=0
    _
  %s15 = ssub.s32 1, %s13
  %s16 = scalar_select 0, %s15, %s13
  // Predicated region
  $region2: #{encoder_forward.8} parent=0 // pred_check
    _
  $region3: #{encoder_forward.8} parent=0 // pred_check_branch
    %18 = sbr.rel (0) target = $region5
  $region4: #{encoder_forward.8} parent=0 // pred_region
    _
  $region5: #{encoder_forward.8} parent=0 // pred_fallthru
    _
  // Predicated region
  $region6: #{encoder_forward.8} parent=0 // pred_check
    _
  $region7: #{encoder_forward.8} parent=0 // pred_check_branch
    %20 = sbr.rel (0) target = $region9
  $region8: #{encoder_forward.8} parent=0 // pred_region
    _
  $region9: #{encoder_forward.8} parent=0 // pred_fallthru
    _
  // Predicated region
  $region10: #{encoder_forward.8} parent=0 // pred_check
    _
  $region11: #{encoder_forward.8} parent=0 // pred_check_branch
    %22 = sbr.rel (0) target = $region13
  $region12: #{encoder_forward.8} parent=0 // pred_region
    _
  $region13: #{encoder_forward.8} parent=0 // pred_fallthru
    _
  // Predicated region
  $region14: #{encoder_forward.8} parent=0 // pred_check
    _
  $region15: #{encoder_forward.8} parent=0 // pred_check_branch
    %24 = sbr.rel (0) target = $region17
  $region16: #{encoder_forward.8} parent=0 // pred_region
    _
  $region17: #{encoder_forward.8} parent=0 // pred_fallthru
    _
  // Predicated region
  $region18: #{encoder_forward.8} parent=0 // pred_check
    _
  $region19: #{encoder_forward.8} parent=0 // pred_check_branch
    %26 = sbr.rel (0) target = $region21
  $region20: #{encoder_forward.8} parent=0 // pred_region
    _
  $region21: #{encoder_forward.8} parent=0 // pred_fallthru
    _
  // Predicated region
  $region22: #{encoder_forward.8} parent=0 // pred_check
    _
  $region23: #{encoder_forward.8} parent=0 // pred_check_branch
    %28 = sbr.rel (0) target = $region25
  $region24: #{encoder_forward.8} parent=0 // pred_region
    _
  $region25: #{encoder_forward.8} parent=0 // pred_fallthru
    _
  // Predicated region
  $region26: #{encoder_forward.8} parent=0 // pred_check
    _
  $region27: #{encoder_forward.8} parent=0 // pred_check_branch
    %30 = sbr.rel (0) target = $region29
  $region28: #{encoder_forward.8} parent=0 // pred_region
    _
  $region29: #{encoder_forward.8} parent=0 // pred_fallthru
    _
  // Predicated region
  $region30: #{encoder_forward.8} parent=0 // pred_check
    _
  $region31: #{encoder_forward.8} parent=0 // pred_check_branch
    %32 = sbr.rel (0) target = $region33
  $region32: #{encoder_forward.8} parent=0 // pred_region
    _
  $region33: #{encoder_forward.8} parent=0 // pred_fallthru
    _
  // Predicated region
  $region34: #{encoder_forward.8} parent=0 // pred_check
    _
  $region35: #{encoder_forward.8} parent=0 // pred_check_branch
    %34 = sbr.rel (0) target = $region37
  $region36: #{encoder_forward.8} parent=0 // pred_region
    _
  $region37: #{encoder_forward.8} parent=0 // pred_fallthru
    _
  // Predicated region
  $region38: #{encoder_forward.8} parent=0 // pred_check
    _
  $region39: #{encoder_forward.8} parent=0 // pred_check_branch
    %36 = sbr.rel (0) target = $region41
  $region40: #{encoder_forward.8} parent=0 // pred_region
    _
  $region41: #{encoder_forward.8} parent=0 // pred_fallthru
    _
  // Predicated region
  $region42: #{encoder_forward.8} parent=0 // pred_check
    _
  $region43: #{encoder_forward.8} parent=0 // pred_check_branch
    %38 = sbr.rel (0) target = $region45
  $region44: #{encoder_forward.8} parent=0 // pred_region
    _
  $region45: #{encoder_forward.8} parent=0 // pred_fallthru
    _
  // Predicated region
  $region46: #{encoder_forward.8} parent=0 // pred_check
    _
  $region47: #{encoder_forward.8} parent=0 // pred_check_branch
    %40 = sbr.rel (0) target = $region49
  $region48: #{encoder_forward.8} parent=0 // pred_region
    _
  $region49: #{encoder_forward.8} parent=0 // pred_fallthru
    _
  %p42 = scmp.eq.s32.totalorder 0, 0
  // Predicated region
  $region50: #{encoder_forward.8} parent=0 // pred_check
    %p43 = pneg %p42
  $region51: #{encoder_forward.8} parent=0 // pred_check_branch
    %45 = sbr.rel (%p43) target = $region53
  $region52: #{encoder_forward.8} parent=0 // pred_region
    %v46 = vld [vmem:[%s0] sm:$0xf]
    %v47 = vld [vmem:[%s0 + $0x4] sm:$0xf]
    %v48 = vld [vmem:[%s2] sm:$0xf]
    %v49 = vld [vmem:[%s2 + $0x4] sm:$0xf]
    %v50 = vld [vmem:[%s2 + $0x8] sm:$0xf]
    %v51 = vld [vmem:[%s2 + $0xc] sm:$0xf]
    %v52 = vld [vmem:[%s3] sm:$0x1]
    %v54 = vperm.slane %v52, 0
    %v58 = vunpack.c.l.b16 %v46
    %v59 = vunpack.c.l.b16 %v47
    %v60 = vpack.c.b16 %v59, %v58
    %v65 = vunpack.c.l.b16 %v48
    %v66 = vunpack.c.l.b16 %v49
    %v67 = vunpack.c.l.b16 %v50
    %v68 = vunpack.c.l.b16 %v51
    %v69 = vpack.c.b16 %v66, %v65
    %v70 = vpack.c.b16 %v68, %v67
    %vm73 = vcmask 261120
    %v75 = vsel %vm73, %v60, 0
    %77 = vmatpush.bf16.msra.mxu0 0
    %78 = vmatpush.bf16.msra.mxu0 0
    %79 = vmatpush.bf16.msra.mxu0 0
    %80 = vmatpush.bf16.msra.mxu0 0
    %81 = vmatpush.bf16.msra.mxu0 0
    %82 = vmatpush.bf16.msra.mxu0 0
    %83 = vmatpush.bf16.msra.mxu0 %v70
    %84 = vmatpush.bf16.msra.mxu0 %v69
    %85 = vmatmul.bf16.gmra.mxu0 %v75
    %v86 = vpop.f32.mrf.mxu0
    %v87 = vadd.f32 %v54, %v86
    %v88 = vpop.f32.mrf.mxu0
    %v89 = vadd.f32 %v54, %v88
    %90 = vdwg.mxu0
    %v91 = vld [vmem:[%s1] sm:$0xf]
    %v92 = vld [vmem:[%s1 + $0x4] sm:$0xf]
    %v93 = vunpack.c.l.bf16 %v91
    %v94 = vunpack.c.l.bf16 %v92
    %v95 = vadd.f32 %v93, %v87
    %v96 = vadd.f32 %v94, %v89
    %v97 = vld [vmem:[%s4] sm:$0x1]
    %v98 = vld [vmem:[%s5] sm:$0x1]
    %v99 = vsel %vm73, %v95, 0.0
    %100 = vadd.xlane.f32.xlu0 %v99
    %v101 = vpop.xlane.xlu0 %100
    %v102 = vsel %vm73, %v96, 0.0
    %103 = vadd.xlane.f32.xlu0 %v102
    %v104 = vpop.xlane.xlu0 %103
    %v105 = vrcp.pop 32.0
    %v106 = vmul.f32 32.0, %v105
    %v107 = vsub.f32 1.0, %v106
    %v108 = vmul.f32 %v105, %v107
    %v109 = vadd.f32 %v105, %v108
    %vm110 = vweird.f32 %v105
    %v111 = vsel %vm110, %v105, %v109
    %v112 = vmul.f32 %v101, %v111
    %v113 = vmul.f32 %v104, %v111
    %v114 = vsub.f32 %v95, %v112
    %v115 = vsub.f32 %v96, %v113
    %v116 = vmul.f32 %v114, %v114
    %v117 = vmul.f32 %v115, %v115
    %v118 = vsel %vm73, %v116, 0.0
    %119 = vadd.xlane.f32.xlu0 %v118
    %v120 = vpop.xlane.xlu0 %119
    %v121 = vsel %vm73, %v117, 0.0
    %122 = vadd.xlane.f32.xlu0 %v121
    %v123 = vpop.xlane.xlu0 %122
    %v124 = vmul.f32 %v120, %v111
    %v125 = vmul.f32 %v123, %v111
    %v126 = vadd.f32 %v124, 1e-05
    %v127 = vadd.f32 %v125, 1e-05
    %v128 = vrsqrt.pop %v126
    %v129 = vmul.f32 %v128, %v126
    %v130 = vmul.f32 %v129, %v128
    %v131 = vmul.f32 0.5, %v130
    %v132 = vsub.f32 1.5, %v131
    %v133 = vmul.f32 %v128, %v132
    %vm134 = vweird.f32 %v126
    %vm135 = vweird.f32 %v128
    %vm136 = vmor %vm134, %vm135
    %v137 = vsel %vm136, %v128, %v133
    %v138 = vrsqrt.pop %v127
    %v139 = vmul.f32 %v138, %v127
    %v140 = vmul.f32 %v139, %v138
    %v141 = vmul.f32 0.5, %v140
    %v142 = vsub.f32 1.5, %v141
    %v143 = vmul.f32 %v138, %v142
    %vm144 = vweird.f32 %v127
    %vm145 = vweird.f32 %v138
    %vm146 = vmor %vm144, %vm145
    %v147 = vsel %vm146, %v138, %v143
    %v148 = vmul.f32 %v114, %v137
    %v149 = vmul.f32 %v115, %v147
    %v151 = vperm.slane %v97, 0
    %v153 = vmul.f32 %v148, %v151
    %v154 = vmul.f32 %v149, %v151
    %v156 = vperm.slane %v98, 0
    %v158 = vadd.f32 %v153, %v156
    %v159 = vadd.f32 %v154, %v156
    %v160 = vpack.c.bf16 %v158, %v158
    %v161 = vpack.c.bf16 %v159, %v159
    %vm162 = vcmask 257024
    %163 = vst.msk [vmem:[#allocation2] sm:$0xf] %vm162, %v160
    %164 = vst.msk [vmem:[#allocation2 + $0x4] sm:$0xf] %vm162, %v161
    %165 = vst.msk [vmem:[#allocation3] sm:$0xff] %vm73, 0.0
    %166 = vst.msk [vmem:[#allocation3 + $0x8] sm:$0xff] %vm73, 0.0
  $region53: #{encoder_forward.8} parent=0 // pred_fallthru
    _
  %v167 = vld [vmem:[#allocation2] sm:$0xf]
  %v168 = vld [vmem:[#allocation2 + $0x4] sm:$0xf]
  %v169 = vld [vmem:[%s6] sm:$0xf]
  %v170 = vld [vmem:[%s6 + $0x4] sm:$0xf]
  %v171 = vld [vmem:[%s6 + $0x8] sm:$0xf]
  %v172 = vld [vmem:[%s6 + $0xc] sm:$0xf]
  %v173 = vld [vmem:[%s7] sm:$0x1]
  %v175 = vperm.slane %v173, 0
  %v179 = vunpack.c.l.b16 %v167
  %v180 = vunpack.c.l.b16 %v168
  %v181 = vpack.c.b16 %v180, %v179
  %v186 = vunpack.c.l.b16 %v169
  %v187 = vunpack.c.l.b16 %v170
  %v188 = vunpack.c.l.b16 %v171
  %v189 = vunpack.c.l.b16 %v172
  %v190 = vpack.c.b16 %v187, %v186
  %v191 = vpack.c.b16 %v189, %v188
  %vm194 = vcmask 261120
  %v196 = vsel %vm194, %v181, 0
  %198 = vmatpush.bf16.msra.mxu0 0
  %199 = vmatpush.bf16.msra.mxu0 0
  %200 = vmatpush.bf16.msra.mxu0 0
  %201 = vmatpush.bf16.msra.mxu0 0
  %202 = vmatpush.bf16.msra.mxu0 0
  %203 = vmatpush.bf16.msra.mxu0 0
  %204 = vmatpush.bf16.msra.mxu0 %v191
  %205 = vmatpush.bf16.msra.mxu0 %v190
  %206 = vmatmul.bf16.gmra.mxu0 %v196
  %v207 = vpop.f32.mrf.mxu0
  %v208 = vadd.f32 %v175, %v207
  %v209 = vpop.f32.mrf.mxu0
  %v210 = vadd.f32 %v175, %v209
  %211 = vdwg.mxu0
  %v212 = vmax.f32 %v208, 0.0
  %v213 = vmax.f32 %v210, 0.0
  %v214 = vld [vmem:[#allocation3] sm:$0xff]
  %v215 = vld [vmem:[#allocation3 + $0x8] sm:$0xff]
  %v216 = vpack.c.bf16 %v213, %v212
  %v217 = vld [vmem:[%s8] sm:$0xf]
  %v218 = vld [vmem:[%s8 + $0x4] sm:$0xf]
  %v219 = vld [vmem:[%s8 + $0x8] sm:$0xf]
  %v220 = vld [vmem:[%s8 + $0xc] sm:$0xf]
  %v221 = vld [vmem:[%s8 + $0x10] sm:$0xf]
  %v222 = vld [vmem:[%s8 + $0x14] sm:$0xf]
  %v223 = vld [vmem:[%s8 + $0x18] sm:$0xf]
  %v224 = vld [vmem:[%s8 + $0x1c] sm:$0xf]
  %v233 = vunpack.c.l.b16 %v217
  %v234 = vunpack.c.l.b16 %v218
  %v235 = vunpack.c.l.b16 %v219
  %v236 = vunpack.c.l.b16 %v220
  %v237 = vunpack.c.l.b16 %v221
  %v238 = vunpack.c.l.b16 %v222
  %v239 = vunpack.c.l.b16 %v223
  %v240 = vunpack.c.l.b16 %v224
  %v241 = vpack.c.b16 %v234, %v233
  %v242 = vpack.c.b16 %v236, %v235
  %v243 = vpack.c.b16 %v238, %v237
  %v244 = vpack.c.b16 %v240, %v239
  %vm249 = vcmask 523264
  %v251 = vsel %vm249, %v216, 0
  %253 = vmatpush.bf16.msra.mxu0 0
  %254 = vmatpush.bf16.msra.mxu0 0
  %255 = vmatpush.bf16.msra.mxu0 0
  %256 = vmatpush.bf16.msra.mxu0 0
  %257 = vmatpush.bf16.msra.mxu0 %v244
  %258 = vmatpush.bf16.msra.mxu0 %v243
  %259 = vmatpush.bf16.msra.mxu0 %v242
  %260 = vmatpush.bf16.msra.mxu0 %v241
  %261 = vmatmul.bf16.gmra.mxu0 %v251
  %v262 = vpop.f32.mrf.mxu0
  %v263 = vadd.f32 0.0, %v262
  %v264 = vpop.f32.mrf.mxu0
  %v265 = vadd.f32 0.0, %v264
  %266 = vdwg.mxu0
  %v267 = vadd.f32 %v214, %v263
  %v268 = vadd.f32 %v215, %v265
  %269 = vst.msk [vmem:[#allocation3] sm:$0xff] %vm194, %v267
  %270 = vst.msk [vmem:[#allocation3 + $0x8] sm:$0xff] %vm194, %v268
  // Predicated region
  $region54: #{encoder_forward.8} parent=0 // pred_check
    %p271 = pneg %p42
  $region55: #{encoder_forward.8} parent=0 // pred_check_branch
    %273 = sbr.rel (%p271) target = $region57
  $region56: #{encoder_forward.8} parent=0 // pred_region
    %v274 = vld [vmem:[#allocation3] sm:$0xff]
    %v275 = vld [vmem:[#allocation3 + $0x8] sm:$0xff]
    %v276 = vld [vmem:[%s9] sm:$0x1]
    %v278 = vperm.slane %v276, 0
    %v280 = vadd.f32 %v274, %v278
    %v281 = vadd.f32 %v275, %v278
    %v282 = vld [vmem:[#allocation2] sm:$0xf]
    %v283 = vld [vmem:[#allocation2 + $0x4] sm:$0xf]
    %v284 = vunpack.c.l.bf16 %v282
    %v285 = vunpack.c.l.bf16 %v283
    %v286 = vadd.f32 %v284, %v280
    %v287 = vadd.f32 %v285, %v281
    %v288 = vld [vmem:[%s10] sm:$0x1]
    %v289 = vld [vmem:[%s11] sm:$0x1]
    %v290 = vsel %vm194, %v286, 0.0
    %291 = vadd.xlane.f32.xlu0 %v290
    %v292 = vpop.xlane.xlu0 %291
    %v293 = vsel %vm194, %v287, 0.0
    %294 = vadd.xlane.f32.xlu0 %v293
    %v295 = vpop.xlane.xlu0 %294
    %v296 = vrcp.pop 32.0
    %v297 = vmul.f32 32.0, %v296
    %v298 = vsub.f32 1.0, %v297
    %v299 = vmul.f32 %v296, %v298
    %v300 = vadd.f32 %v296, %v299
    %vm301 = vweird.f32 %v296
    %v302 = vsel %vm301, %v296, %v300
    %v303 = vmul.f32 %v292, %v302
    %v304 = vmul.f32 %v295, %v302
    %v305 = vsub.f32 %v286, %v303
    %v306 = vsub.f32 %v287, %v304
    %v307 = vmul.f32 %v305, %v305
    %v308 = vmul.f32 %v306, %v306
    %v309 = vsel %vm194, %v307, 0.0
    %310 = vadd.xlane.f32.xlu0 %v309
    %v311 = vpop.xlane.xlu0 %310
    %v312 = vsel %vm194, %v308, 0.0
    %313 = vadd.xlane.f32.xlu0 %v312
    %v314 = vpop.xlane.xlu0 %313
    %v315 = vmul.f32 %v311, %v302
    %v316 = vmul.f32 %v314, %v302
    %v317 = vadd.f32 %v315, 1e-05
    %v318 = vadd.f32 %v316, 1e-05
    %v319 = vrsqrt.pop %v317
    %v320 = vmul.f32 %v319, %v317
    %v321 = vmul.f32 %v320, %v319
    %v322 = vmul.f32 0.5, %v321
    %v323 = vsub.f32 1.5, %v322
    %v324 = vmul.f32 %v319, %v323
    %vm325 = vweird.f32 %v317
    %vm326 = vweird.f32 %v319
    %vm327 = vmor %vm325, %vm326
    %v328 = vsel %vm327, %v319, %v324
    %v329 = vrsqrt.pop %v318
    %v330 = vmul.f32 %v329, %v318
    %v331 = vmul.f32 %v330, %v329
    %v332 = vmul.f32 0.5, %v331
    %v333 = vsub.f32 1.5, %v332
    %v334 = vmul.f32 %v329, %v333
    %vm335 = vweird.f32 %v318
    %vm336 = vweird.f32 %v329
    %vm337 = vmor %vm335, %vm336
    %v338 = vsel %vm337, %v329, %v334
    %v339 = vmul.f32 %v305, %v328
    %v340 = vmul.f32 %v306, %v338
    %v342 = vperm.slane %v288, 0
    %v344 = vmul.f32 %v339, %v342
    %v345 = vmul.f32 %v340, %v342
    %v347 = vperm.slane %v289, 0
    %v349 = vadd.f32 %v344, %v347
    %v350 = vadd.f32 %v345, %v347
    %v351 = vpack.c.bf16 %v349, %v349
    %v352 = vpack.c.bf16 %v350, %v350
    %vm353 = vcmask 257024
    %354 = vst.msk [vmem:[%s12] sm:$0xf] %vm353, %v351
    %355 = vst.msk [vmem:[%s12 + $0x4] sm:$0xf] %vm353, %v352
  $region57: #{encoder_forward.8} parent=0 // pred_fallthru
    _
  // Predicated region
  $region58: #{encoder_forward.8} parent=0 // pred_check
    _
  $region59: #{encoder_forward.8} parent=0 // pred_check_branch
    %357 = sbr.rel (0) target = $region61
  $region60: #{encoder_forward.8} parent=0 // pred_region
    _
  $region61: #{encoder_forward.8} parent=0 // pred_fallthru
    _
  // Predicated region
  $region62: #{encoder_forward.8} parent=0 // pred_check
    _
  $region63: #{encoder_forward.8} parent=0 // pred_check_branch
    %359 = sbr.rel (0) target = $region65
  $region64: #{encoder_forward.8} parent=0 // pred_region
    _
  $region65: #{encoder_forward.8} parent=0 // pred_fallthru
    _

// kernel: encoder_forward.11
$region0: #{encoder_forward.11}
  #allocation0 [shape = 'u32[]', space=smem, size = 0x4, offset = 0x4, fixed_abs, tag = 'smem constant byte address 0x4 - core index']
  #allocation1 [shape = 'u32[72,128]{1,0:T(1,128)}', space=vmem, size = 0x9000, scoped, tag = 'internal scratch']
  #allocation2 [shape = 'bf16[16,32]{1,0:T(8,128)(2,1)}', space=vmem, size = 0x1000, scoped, tag = 'scratch operand']
  #allocation3 [shape = 'f32[16,32]{1,0:T(8,128)}', space=vmem, size = 0x2000, scoped, tag = 'scratch operand']
  %s0 = inlined_call_operand.vmem [shape: bf16[16,32], index: 0, kind: input, shape index: {}]
  %s1 = inlined_call_operand.vmem [shape: bf16[16,32], index: 1, kind: input, shape index: {}]
  %s2 = inlined_call_operand.vmem [shape: bf16[32,32], index: 2, kind: input, shape index: {}]
  %s3 = inlined_call_operand.vmem [shape: f32[1,32], index: 3, kind: input, shape index: {}]
  %s4 = inlined_call_operand.vmem [shape: f32[1,32], index: 4, kind: input, shape index: {}]
  %s5 = inlined_call_operand.vmem [shape: f32[1,32], index: 5, kind: input, shape index: {}]
  %s6 = inlined_call_operand.vmem [shape: bf16[32,64], index: 6, kind: input, shape index: {}]
  %s7 = inlined_call_operand.vmem [shape: f32[1,64], index: 7, kind: input, shape index: {}]
  %s8 = inlined_call_operand.vmem [shape: bf16[64,32], index: 8, kind: input, shape index: {}]
  %s9 = inlined_call_operand.vmem [shape: f32[1,32], index: 9, kind: input, shape index: {}]
  %s10 = inlined_call_operand.vmem [shape: f32[1,32], index: 10, kind: input, shape index: {}]
  %s11 = inlined_call_operand.vmem [shape: f32[1,32], index: 11, kind: input, shape index: {}]
  %s12 = inlined_call_operand.hbm [shape: f32[16,32], index: 12, kind: output, shape index: {}]
  %s13 = sld [smem:[#allocation0]]
  $region66: #{encoder_forward.11} parent=0
    _
  %s15 = ssub.s32 1, %s13
  %s16 = scalar_select 0, %s15, %s13
  $region1: #{encoder_forward.11} parent=0
    #allocation4 [shape = 'u8[8192]{0}', space=vmem, size = 0x2000, scoped, tag = 'output window, operand 0, single buffered']
    #allocation5 [shape = 's32[1]{0}', space=sflag, size = 0x4, scoped, tag = 'scoped memory for encoder_forward.11']
    %17 = vsyncpa [#allocation5], 0
    // Predicated region
    $region2: #{encoder_forward.11} parent=1 // pred_check
      _
    $region3: #{encoder_forward.11} parent=1 // pred_check_branch
      %19 = sbr.rel (0) target = $region5
    $region4: #{encoder_forward.11} parent=1 // pred_region
      _
    $region5: #{encoder_forward.11} parent=1 // pred_fallthru
      _
    // Predicated region
    $region6: #{encoder_forward.11} parent=1 // pred_check
      _
    $region7: #{encoder_forward.11} parent=1 // pred_check_branch
      %21 = sbr.rel (0) target = $region9
    $region8: #{encoder_forward.11} parent=1 // pred_region
      _
    $region9: #{encoder_forward.11} parent=1 // pred_fallthru
      _
    // Predicated region
    $region10: #{encoder_forward.11} parent=1 // pred_check
      _
    $region11: #{encoder_forward.11} parent=1 // pred_check_branch
      %23 = sbr.rel (0) target = $region13
    $region12: #{encoder_forward.11} parent=1 // pred_region
      _
    $region13: #{encoder_forward.11} parent=1 // pred_fallthru
      _
    // Predicated region
    $region14: #{encoder_forward.11} parent=1 // pred_check
      _
    $region15: #{encoder_forward.11} parent=1 // pred_check_branch
      %25 = sbr.rel (0) target = $region17
    $region16: #{encoder_forward.11} parent=1 // pred_region
      _
    $region17: #{encoder_forward.11} parent=1 // pred_fallthru
      _
    // Predicated region
    $region18: #{encoder_forward.11} parent=1 // pred_check
      _
    $region19: #{encoder_forward.11} parent=1 // pred_check_branch
      %27 = sbr.rel (0) target = $region21
    $region20: #{encoder_forward.11} parent=1 // pred_region
      _
    $region21: #{encoder_forward.11} parent=1 // pred_fallthru
      _
    // Predicated region
    $region22: #{encoder_forward.11} parent=1 // pred_check
      _
    $region23: #{encoder_forward.11} parent=1 // pred_check_branch
      %29 = sbr.rel (0) target = $region25
    $region24: #{encoder_forward.11} parent=1 // pred_region
      _
    $region25: #{encoder_forward.11} parent=1 // pred_fallthru
      _
    // Predicated region
    $region26: #{encoder_forward.11} parent=1 // pred_check
      _
    $region27: #{encoder_forward.11} parent=1 // pred_check_branch
      %31 = sbr.rel (0) target = $region29
    $region28: #{encoder_forward.11} parent=1 // pred_region
      _
    $region29: #{encoder_forward.11} parent=1 // pred_fallthru
      _
    // Predicated region
    $region30: #{encoder_forward.11} parent=1 // pred_check
      _
    $region31: #{encoder_forward.11} parent=1 // pred_check_branch
      %33 = sbr.rel (0) target = $region33
    $region32: #{encoder_forward.11} parent=1 // pred_region
      _
    $region33: #{encoder_forward.11} parent=1 // pred_fallthru
      _
    // Predicated region
    $region34: #{encoder_forward.11} parent=1 // pred_check
      _
    $region35: #{encoder_forward.11} parent=1 // pred_check_branch
      %35 = sbr.rel (0) target = $region37
    $region36: #{encoder_forward.11} parent=1 // pred_region
      _
    $region37: #{encoder_forward.11} parent=1 // pred_fallthru
      _
    // Predicated region
    $region38: #{encoder_forward.11} parent=1 // pred_check
      _
    $region39: #{encoder_forward.11} parent=1 // pred_check_branch
      %37 = sbr.rel (0) target = $region41
    $region40: #{encoder_forward.11} parent=1 // pred_region
      _
    $region41: #{encoder_forward.11} parent=1 // pred_fallthru
      _
    // Predicated region
    $region42: #{encoder_forward.11} parent=1 // pred_check
      _
    $region43: #{encoder_forward.11} parent=1 // pred_check_branch
      %39 = sbr.rel (0) target = $region45
    $region44: #{encoder_forward.11} parent=1 // pred_region
      _
    $region45: #{encoder_forward.11} parent=1 // pred_fallthru
      _
    // Predicated region
    $region46: #{encoder_forward.11} parent=1 // pred_check
      _
    $region47: #{encoder_forward.11} parent=1 // pred_check_branch
      %41 = sbr.rel (0) target = $region49
    $region48: #{encoder_forward.11} parent=1 // pred_region
      _
    $region49: #{encoder_forward.11} parent=1 // pred_fallthru
      _
    %p43 = scmp.eq.s32.totalorder 0, 0
    // Predicated region
    $region50: #{encoder_forward.11} parent=1 // pred_check
      %p44 = pneg %p43
    $region51: #{encoder_forward.11} parent=1 // pred_check_branch
      %46 = sbr.rel (%p44) target = $region53
    $region52: #{encoder_forward.11} parent=1 // pred_region
      %v47 = vld [vmem:[%s0] sm:$0xf]
      %v48 = vld [vmem:[%s0 + $0x4] sm:$0xf]
      %v49 = vld [vmem:[%s2] sm:$0xf]
      %v50 = vld [vmem:[%s2 + $0x4] sm:$0xf]
      %v51 = vld [vmem:[%s2 + $0x8] sm:$0xf]
      %v52 = vld [vmem:[%s2 + $0xc] sm:$0xf]
      %v53 = vld [vmem:[%s3] sm:$0x1]
      %v55 = vperm.slane %v53, 0
      %v59 = vunpack.c.l.b16 %v47
      %v60 = vunpack.c.l.b16 %v48
      %v61 = vpack.c.b16 %v60, %v59
      %v66 = vunpack.c.l.b16 %v49
      %v67 = vunpack.c.l.b16 %v50
      %v68 = vunpack.c.l.b16 %v51
      %v69 = vunpack.c.l.b16 %v52
      %v70 = vpack.c.b16 %v67, %v66
      %v71 = vpack.c.b16 %v69, %v68
      %vm74 = vcmask 261120
      %v76 = vsel %vm74, %v61, 0
      %78 = vmatpush.bf16.msra.mxu0 0
      %79 = vmatpush.bf16.msra.mxu0 0
      %80 = vmatpush.bf16.msra.mxu0 0
      %81 = vmatpush.bf16.msra.mxu0 0
      %82 = vmatpush.bf16.msra.mxu0 0
      %83 = vmatpush.bf16.msra.mxu0 0
      %84 = vmatpush.bf16.msra.mxu0 %v71
      %85 = vmatpush.bf16.msra.mxu0 %v70
      %86 = vmatmul.bf16.gmra.mxu0 %v76
      %v87 = vpop.f32.mrf.mxu0
      %v88 = vadd.f32 %v55, %v87
      %v89 = vpop.f32.mrf.mxu0
      %v90 = vadd.f32 %v55, %v89
      %91 = vdwg.mxu0
      %v92 = vld [vmem:[%s1] sm:$0xf]
      %v93 = vld [vmem:[%s1 + $0x4] sm:$0xf]
      %v94 = vunpack.c.l.bf16 %v92
      %v95 = vunpack.c.l.bf16 %v93
      %v96 = vadd.f32 %v94, %v88
      %v97 = vadd.f32 %v95, %v90
      %v98 = vld [vmem:[%s4] sm:$0x1]
      %v99 = vld [vmem:[%s5] sm:$0x1]
      %v100 = vsel %vm74, %v96, 0.0
      %101 = vadd.xlane.f32.xlu0 %v100
      %v102 = vpop.xlane.xlu0 %101
      %v103 = vsel %vm74, %v97, 0.0
      %104 = vadd.xlane.f32.xlu0 %v103
      %v105 = vpop.xlane.xlu0 %104
      %v106 = vrcp.pop 32.0
      %v107 = vmul.f32 32.0, %v106
      %v108 = vsub.f32 1.0, %v107
      %v109 = vmul.f32 %v106, %v108
      %v110 = vadd.f32 %v106, %v109
      %vm111 = vweird.f32 %v106
      %v112 = vsel %vm111, %v106, %v110
      %v113 = vmul.f32 %v102, %v112
      %v114 = vmul.f32 %v105, %v112
      %v115 = vsub.f32 %v96, %v113
      %v116 = vsub.f32 %v97, %v114
      %v117 = vmul.f32 %v115, %v115
      %v118 = vmul.f32 %v116, %v116
      %v119 = vsel %vm74, %v117, 0.0
      %120 = vadd.xlane.f32.xlu0 %v119
      %v121 = vpop.xlane.xlu0 %120
      %v122 = vsel %vm74, %v118, 0.0
      %123 = vadd.xlane.f32.xlu0 %v122
      %v124 = vpop.xlane.xlu0 %123
      %v125 = vmul.f32 %v121, %v112
      %v126 = vmul.f32 %v124, %v112
      %v127 = vadd.f32 %v125, 1e-05
      %v128 = vadd.f32 %v126, 1e-05
      %v129 = vrsqrt.pop %v127
      %v130 = vmul.f32 %v129, %v127
      %v131 = vmul.f32 %v130, %v129
      %v132 = vmul.f32 0.5, %v131
      %v133 = vsub.f32 1.5, %v132
      %v134 = vmul.f32 %v129, %v133
      %vm135 = vweird.f32 %v127
      %vm136 = vweird.f32 %v129
      %vm137 = vmor %vm135, %vm136
      %v138 = vsel %vm137, %v129, %v134
      %v139 = vrsqrt.pop %v128
      %v140 = vmul.f32 %v139, %v128
      %v141 = vmul.f32 %v140, %v139
      %v142 = vmul.f32 0.5, %v141
      %v143 = vsub.f32 1.5, %v142
      %v144 = vmul.f32 %v139, %v143
      %vm145 = vweird.f32 %v128
      %vm146 = vweird.f32 %v139
      %vm147 = vmor %vm145, %vm146
      %v148 = vsel %vm147, %v139, %v144
      %v149 = vmul.f32 %v115, %v138
      %v150 = vmul.f32 %v116, %v148
      %v152 = vperm.slane %v98, 0
      %v154 = vmul.f32 %v149, %v152
      %v155 = vmul.f32 %v150, %v152
      %v157 = vperm.slane %v99, 0
      %v159 = vadd.f32 %v154, %v157
      %v160 = vadd.f32 %v155, %v157
      %v161 = vpack.c.bf16 %v159, %v159
      %v162 = vpack.c.bf16 %v160, %v160
      %vm163 = vcmask 257024
      %164 = vst.msk [vmem:[#allocation2] sm:$0xf] %vm163, %v161
      %165 = vst.msk [vmem:[#allocation2 + $0x4] sm:$0xf] %vm163, %v162
      %166 = vst.msk [vmem:[#allocation3] sm:$0xff] %vm74, 0.0
      %167 = vst.msk [vmem:[#allocation3 + $0x8] sm:$0xff] %vm74, 0.0
    $region53: #{encoder_forward.11} parent=1 // pred_fallthru
      _
    %v168 = vld [vmem:[#allocation2] sm:$0xf]
    %v169 = vld [vmem:[#allocation2 + $0x4] sm:$0xf]
    %v170 = vld [vmem:[%s6] sm:$0xf]
    %v171 = vld [vmem:[%s6 + $0x4] sm:$0xf]
    %v172 = vld [vmem:[%s6 + $0x8] sm:$0xf]
    %v173 = vld [vmem:[%s6 + $0xc] sm:$0xf]
    %v174 = vld [vmem:[%s7] sm:$0x1]
    %v176 = vperm.slane %v174, 0
    %v180 = vunpack.c.l.b16 %v168
    %v181 = vunpack.c.l.b16 %v169
    %v182 = vpack.c.b16 %v181, %v180
    %v187 = vunpack.c.l.b16 %v170
    %v188 = vunpack.c.l.b16 %v171
    %v189 = vunpack.c.l.b16 %v172
    %v190 = vunpack.c.l.b16 %v173
    %v191 = vpack.c.b16 %v188, %v187
    %v192 = vpack.c.b16 %v190, %v189
    %vm195 = vcmask 261120
    %v197 = vsel %vm195, %v182, 0
    %199 = vmatpush.bf16.msra.mxu0 0
    %200 = vmatpush.bf16.msra.mxu0 0
    %201 = vmatpush.bf16.msra.mxu0 0
    %202 = vmatpush.bf16.msra.mxu0 0
    %203 = vmatpush.bf16.msra.mxu0 0
    %204 = vmatpush.bf16.msra.mxu0 0
    %205 = vmatpush.bf16.msra.mxu0 %v192
    %206 = vmatpush.bf16.msra.mxu0 %v191
    %207 = vmatmul.bf16.gmra.mxu0 %v197
    %v208 = vpop.f32.mrf.mxu0
    %v209 = vadd.f32 %v176, %v208
    %v210 = vpop.f32.mrf.mxu0
    %v211 = vadd.f32 %v176, %v210
    %212 = vdwg.mxu0
    %v213 = vmax.f32 %v209, 0.0
    %v214 = vmax.f32 %v211, 0.0
    %v215 = vld [vmem:[#allocation3] sm:$0xff]
    %v216 = vld [vmem:[#allocation3 + $0x8] sm:$0xff]
    %v217 = vpack.c.bf16 %v214, %v213
    %v218 = vld [vmem:[%s8] sm:$0xf]
    %v219 = vld [vmem:[%s8 + $0x4] sm:$0xf]
    %v220 = vld [vmem:[%s8 + $0x8] sm:$0xf]
    %v221 = vld [vmem:[%s8 + $0xc] sm:$0xf]
    %v222 = vld [vmem:[%s8 + $0x10] sm:$0xf]
    %v223 = vld [vmem:[%s8 + $0x14] sm:$0xf]
    %v224 = vld [vmem:[%s8 + $0x18] sm:$0xf]
    %v225 = vld [vmem:[%s8 + $0x1c] sm:$0xf]
    %v234 = vunpack.c.l.b16 %v218
    %v235 = vunpack.c.l.b16 %v219
    %v236 = vunpack.c.l.b16 %v220
    %v237 = vunpack.c.l.b16 %v221
    %v238 = vunpack.c.l.b16 %v222
    %v239 = vunpack.c.l.b16 %v223
    %v240 = vunpack.c.l.b16 %v224
    %v241 = vunpack.c.l.b16 %v225
    %v242 = vpack.c.b16 %v235, %v234
    %v243 = vpack.c.b16 %v237, %v236
    %v244 = vpack.c.b16 %v239, %v238
    %v245 = vpack.c.b16 %v241, %v240
    %vm250 = vcmask 523264
    %v252 = vsel %vm250, %v217, 0
    %254 = vmatpush.bf16.msra.mxu0 0
    %255 = vmatpush.bf16.msra.mxu0 0
    %256 = vmatpush.bf16.msra.mxu0 0
    %257 = vmatpush.bf16.msra.mxu0 0
    %258 = vmatpush.bf16.msra.mxu0 %v245
    %259 = vmatpush.bf16.msra.mxu0 %v244
    %260 = vmatpush.bf16.msra.mxu0 %v243
    %261 = vmatpush.bf16.msra.mxu0 %v242
    %262 = vmatmul.bf16.gmra.mxu0 %v252
    %v263 = vpop.f32.mrf.mxu0
    %v264 = vadd.f32 0.0, %v263
    %v265 = vpop.f32.mrf.mxu0
    %v266 = vadd.f32 0.0, %v265
    %267 = vdwg.mxu0
    %v268 = vadd.f32 %v215, %v264
    %v269 = vadd.f32 %v216, %v266
    %270 = vst.msk [vmem:[#allocation3] sm:$0xff] %vm195, %v268
    %271 = vst.msk [vmem:[#allocation3 + $0x8] sm:$0xff] %vm195, %v269
    // Predicated region
    $region54: #{encoder_forward.11} parent=1 // pred_check
      %p272 = pneg %p43
    $region55: #{encoder_forward.11} parent=1 // pred_check_branch
      %274 = sbr.rel (%p272) target = $region57
    $region56: #{encoder_forward.11} parent=1 // pred_region
      %v275 = vld [vmem:[#allocation3] sm:$0xff]
      %v276 = vld [vmem:[#allocation3 + $0x8] sm:$0xff]
      %v277 = vld [vmem:[%s9] sm:$0x1]
      %v279 = vperm.slane %v277, 0
      %v281 = vadd.f32 %v275, %v279
      %v282 = vadd.f32 %v276, %v279
      %v283 = vld [vmem:[#allocation2] sm:$0xf]
      %v284 = vld [vmem:[#allocation2 + $0x4] sm:$0xf]
      %v285 = vunpack.c.l.bf16 %v283
      %v286 = vunpack.c.l.bf16 %v284
      %v287 = vadd.f32 %v285, %v281
      %v288 = vadd.f32 %v286, %v282
      %v289 = vld [vmem:[%s10] sm:$0x1]
      %v290 = vld [vmem:[%s11] sm:$0x1]
      %v291 = vsel %vm195, %v287, 0.0
      %292 = vadd.xlane.f32.xlu0 %v291
      %v293 = vpop.xlane.xlu0 %292
      %v294 = vsel %vm195, %v288, 0.0
      %295 = vadd.xlane.f32.xlu0 %v294
      %v296 = vpop.xlane.xlu0 %295
      %v297 = vrcp.pop 32.0
      %v298 = vmul.f32 32.0, %v297
      %v299 = vsub.f32 1.0, %v298
      %v300 = vmul.f32 %v297, %v299
      %v301 = vadd.f32 %v297, %v300
      %vm302 = vweird.f32 %v297
      %v303 = vsel %vm302, %v297, %v301
      %v304 = vmul.f32 %v293, %v303
      %v305 = vmul.f32 %v296, %v303
      %v306 = vsub.f32 %v287, %v304
      %v307 = vsub.f32 %v288, %v305
      %v308 = vmul.f32 %v306, %v306
      %v309 = vmul.f32 %v307, %v307
      %v310 = vsel %vm195, %v308, 0.0
      %311 = vadd.xlane.f32.xlu0 %v310
      %v312 = vpop.xlane.xlu0 %311
      %v313 = vsel %vm195, %v309, 0.0
      %314 = vadd.xlane.f32.xlu0 %v313
      %v315 = vpop.xlane.xlu0 %314
      %v316 = vmul.f32 %v312, %v303
      %v317 = vmul.f32 %v315, %v303
      %v318 = vadd.f32 %v316, 1e-05
      %v319 = vadd.f32 %v317, 1e-05
      %v320 = vrsqrt.pop %v318
      %v321 = vmul.f32 %v320, %v318
      %v322 = vmul.f32 %v321, %v320
      %v323 = vmul.f32 0.5, %v322
      %v324 = vsub.f32 1.5, %v323
      %v325 = vmul.f32 %v320, %v324
      %vm326 = vweird.f32 %v318
      %vm327 = vweird.f32 %v320
      %vm328 = vmor %vm326, %vm327
      %v329 = vsel %vm328, %v320, %v325
      %v330 = vrsqrt.pop %v319
      %v331 = vmul.f32 %v330, %v319
      %v332 = vmul.f32 %v331, %v330
      %v333 = vmul.f32 0.5, %v332
      %v334 = vsub.f32 1.5, %v333
      %v335 = vmul.f32 %v330, %v334
      %vm336 = vweird.f32 %v319
      %vm337 = vweird.f32 %v330
      %vm338 = vmor %vm336, %vm337
      %v339 = vsel %vm338, %v330, %v335
      %v340 = vmul.f32 %v306, %v329
      %v341 = vmul.f32 %v307, %v339
      %v343 = vperm.slane %v289, 0
      %v345 = vmul.f32 %v340, %v343
      %v346 = vmul.f32 %v341, %v343
      %v348 = vperm.slane %v290, 0
      %v350 = vadd.f32 %v345, %v348
      %v351 = vadd.f32 %v346, %v348
      %352 = vst.msk [vmem:[#allocation4] sm:$0xff] %vm195, %v350
      %353 = vst.msk [vmem:[#allocation4 + $0x8] sm:$0xff] %vm195, %v351
    $region57: #{encoder_forward.11} parent=1 // pred_fallthru
      _
    // Predicated region
    $region58: #{encoder_forward.11} parent=1 // pred_check
      _
    $region59: #{encoder_forward.11} parent=1 // pred_check_branch
      %355 = sbr.rel (0) target = $region61
    $region60: #{encoder_forward.11} parent=1 // pred_region
      %357 = vsyncadd [#allocation5], 0
      %s358 = sshll.u32 [#allocation4], 4
      %s359 = int_to_ptr.vmem [resolvable:$true] %s358
      %s360 = sshll.u32 %s12, 4
      %s361 = int_to_ptr.hbm [resolvable:$true] %s360
      %366 = dma.vmem_to_hbm [thread:$0]  %s359, 256, %s361, [#allocation5], 128, 128, 8
    $region61: #{encoder_forward.11} parent=1 // pred_fallthru
      _
    // Predicated region
    $region62: #{encoder_forward.11} parent=1 // pred_check
      _
    $region63: #{encoder_forward.11} parent=1 // pred_check_branch
      %368 = sbr.rel (0) target = $region65
    $region64: #{encoder_forward.11} parent=1 // pred_region
      %370 = dma.done [#allocation5], 256
    $region65: #{encoder_forward.11} parent=1 // pred_fallthru
      _
    %371 = vsyncpa [#allocation5], 1

</llo_original>
